<compile_context>
chip_gen: v6e
topology: v6e:2x2x1
jax: 0.10.0
libtpu: 0.0.40
codegen_flags: <defaults>
</compile_context>

<pallas_src>
import jax
import jax.numpy as jnp
from jax import lax
from jax.experimental import pallas as pl
from jax.experimental.pallas import tpu as pltpu

# Small synthetic config (mirrors config.embedding_dim / hidden_dim / vocab_size)
VOCAB = 64
EMB = 32      # embedding_dim
HID = 32      # hidden_dim
SEQ = 8       # words per question (fixed length for the synthetic kernel)
BATCH = 2     # number of (q1, q2) pairs


def _siamese_lstm_kernel(x_ref, h0_ref, c0_ref, wih_ref, whh_ref, b_ref, out_ref):
    # One MXU call: input projection (+ bias) for all BATCH*2*SEQ stacked word
    # rows.  Row p*2*SEQ + 2t (+1) is word t of pair p's q1 (q2).
    xg = (jnp.dot(x_ref[...], wih_ref[...], preferred_element_type=jnp.float32)
          + b_ref[...])                                        # (32, 4*HID)

    whh = whh_ref[...]                 # (HID, 4*HID), hoisted out of the loops
    h = h0_ref[...]                    # (2, HID): row 0 = encoder-1, row 1 = encoder-2
    c = c0_ref[...]                    # (2, HID)

    lane = lax.broadcasted_iota(jnp.int32, (1, BATCH), 1)       # hoisted
    preds = jnp.zeros((1, BATCH), jnp.float32)

    # q1 and q2 use independent (h,c) rows, so interleaving their per-word
    # loops (one stacked step per t) is equivalent to running them
    # back-to-back.  BATCH and SEQ are static Python ints -> fully unrolled.
    for p in range(BATCH):
        base = p * 2 * SEQ
        for t in range(SEQ):
            r = base + 2 * t
            g = xg[r:r + 2, :] + jnp.dot(h, whh,
                                         preferred_element_type=jnp.float32)  # (2, 4*HID)
            sg = jax.nn.sigmoid(g[:, :3 * HID])                 # [i | f | o]
            gg = jnp.tanh(g[:, 3 * HID:])                       # cell candidate
            c = sg[:, HID:2 * HID] * c + sg[:, :HID] * gg
            h = sg[:, 2 * HID:3 * HID] * jnp.tanh(c)
        # pred[p] = exp(-L1(h1 - h2)) for the state *after* this pair.
        l1 = jnp.sum(jnp.abs(h[0:1, :] - h[1:2, :]), axis=-1, keepdims=True)  # (1,1)
        preds = jnp.where(lane == p, jnp.exp(-l1), preds)

    out_ref[...] = preds               # single full-row store at the end


def siamese_lstm_forward(q1, q2, emb, w_ih, w_hh, b_ih, b_hh, h0, c0):
    """q1, q2: (BATCH, SEQ) int32 word ids.  Returns pred: (BATCH,) f32."""
    # Glue: embedding lookup + fused-gate weight re-layout.
    x1 = emb[q1].astype(jnp.float32)                     # (B, SEQ, EMB)
    x2 = emb[q2].astype(jnp.float32)                     # (B, SEQ, EMB)
    # Interleave q1/q2 word t into adjacent rows: row 2t = q1_t, row 2t+1 = q2_t,
    # then flatten the pair dimension on top: (BATCH*2*SEQ, EMB).
    x = jnp.stack([x1, x2], axis=2).reshape(BATCH * 2 * SEQ, EMB)

    # PyTorch gate order is [i, f, g, o]; fuse as columns in order [i, f, o, g]
    # so sigmoid / tanh each act on one contiguous lane range.
    order = jnp.array([0, 1, 3, 2], dtype=jnp.int32)
    wih4 = w_ih.reshape(4, HID, EMB)[order]                       # (4, HID, EMB)
    whh4 = w_hh.reshape(4, HID, HID)[order]                       # (4, HID, HID)
    wih_f = jnp.transpose(wih4, (2, 0, 1)).reshape(EMB, 4 * HID)  # (EMB, 4*HID)
    whh_f = jnp.transpose(whh4, (2, 0, 1)).reshape(HID, 4 * HID)  # (HID, 4*HID)
    b_f = (b_ih + b_hh).reshape(4, HID)[order].reshape(1, 4 * HID)

    h0f = h0.reshape(2, HID)
    c0f = c0.reshape(2, HID)

    vmem = pl.BlockSpec(memory_space=pltpu.MemorySpace.VMEM)      # whole-array blocks
    out = pl.pallas_call(
        _siamese_lstm_kernel,
        out_shape=jax.ShapeDtypeStruct((1, BATCH), jnp.float32),
        in_specs=[vmem, vmem, vmem, vmem, vmem, vmem],
        out_specs=vmem,
    )(x, h0f, c0f, wih_f, whh_f, b_f)
    return out[0]


def _ref_forward(q1, q2, emb, w_ih, w_hh, b_ih, b_hh, h0, c0):
    """Pure-JAX reference mirroring the PyTorch forward exactly."""
    wih4 = jnp.transpose(w_ih.reshape(4, HID, EMB), (0, 2, 1))
    whh4 = jnp.transpose(w_hh.reshape(4, HID, HID), (0, 2, 1))
    b4 = (b_ih + b_hh).reshape(4, 1, HID)

    def step(x, h, c):
        ig = jax.nn.sigmoid(x @ wih4[0] + h @ whh4[0] + b4[0])
        fg = jax.nn.sigmoid(x @ wih4[1] + h @ whh4[1] + b4[1])
        gg = jnp.tanh(x @ wih4[2] + h @ whh4[2] + b4[2])
        og = jax.nn.sigmoid(x @ wih4[3] + h @ whh4[3] + b4[3])
        c = fg * c + ig * gg
        h = og * jnp.tanh(c)
        return h, c

    h1, c1 = h0[0], c0[0]
    h2, c2 = h0[1], c0[1]
    preds = []
    for i in range(BATCH):
        for t in range(SEQ):
            h1, c1 = step(emb[q1[i, t]][None, :], h1, c1)
        for t in range(SEQ):
            h2, c2 = step(emb[q2[i, t]][None, :], h2, c2)
        preds.append(jnp.exp(-jnp.sum(jnp.abs(h1 - h2))))
    return jnp.stack(preds)


if __name__ == "__main__":
    key = jax.random.PRNGKey(0)
    ks = jax.random.split(key, 8)

    # Deterministic parameter init (shapes per nn.Embedding / nn.LSTM).
    emb = jax.random.normal(ks[0], (VOCAB, EMB), jnp.float32)
    scale = 1.0 / (HID ** 0.5)
    w_ih = jax.random.uniform(ks[1], (4 * HID, EMB), jnp.float32, -scale, scale)
    w_hh = jax.random.uniform(ks[2], (4 * HID, HID), jnp.float32, -scale, scale)
    b_ih = jax.random.uniform(ks[3], (4 * HID,), jnp.float32, -scale, scale)
    b_hh = jax.random.uniform(ks[4], (4 * HID,), jnp.float32, -scale, scale)
    # init_hidden() is torch.randn; done deterministically here (2 encoder states).
    h0 = jax.random.normal(ks[5], (2, 1, HID), jnp.float32)
    c0 = jax.random.normal(ks[6], (2, 1, HID), jnp.float32)

    # Batch of BATCH question pairs, each question SEQ word ids.
    # TODO(synk): original batch is ragged (variable-length questions); fixed SEQ used here.
    toks = jax.random.randint(ks[7], (BATCH, 2, SEQ), 0, VOCAB, dtype=jnp.int32)
    q1, q2 = toks[:, 0, :], toks[:, 1, :]

    pred = siamese_lstm_forward(q1, q2, emb, w_ih, w_hh, b_ih, b_hh, h0, c0)
    pred = jax.block_until_ready(pred)

    ref = _ref_forward(q1, q2, emb, w_ih, w_hh, b_ih, b_hh, h0, c0)
    assert pred.shape == (BATCH,)
    assert jnp.allclose(pred, ref, atol=2e-3, rtol=2e-3), (pred, ref)
    print("KERNEL_OK")
</pallas_src>

<mosaic_0001>
module attributes {stable_mosaic.version = 11 : i64} {
  func.func @_siamese_lstm_kernel(%arg0: memref<32x32xf32, #tpu.memory_space<vmem>>, %arg1: memref<2x32xf32, #tpu.memory_space<vmem>>, %arg2: memref<2x32xf32, #tpu.memory_space<vmem>>, %arg3: memref<32x128xf32, #tpu.memory_space<vmem>>, %arg4: memref<32x128xf32, #tpu.memory_space<vmem>>, %arg5: memref<1x128xf32, #tpu.memory_space<vmem>>, %arg6: memref<1x2xf32, #tpu.memory_space<vmem>>) attributes {dimension_semantics = [], scalar_prefetch = 0 : i64, scratch_operands = 0 : i64, tpu.core_type = #tpu.core_type<tc>} {
    %c0 = arith.constant 0 : index
    %c0_0 = arith.constant 0 : index
    %0 = vector.load %arg0[%c0, %c0_0] : memref<32x32xf32, #tpu.memory_space<vmem>>, vector<32x32xf32>
    %c0_1 = arith.constant 0 : index
    %c0_2 = arith.constant 0 : index
    %1 = vector.load %arg3[%c0_1, %c0_2] : memref<32x128xf32, #tpu.memory_space<vmem>>, vector<32x128xf32>
    %cst = arith.constant dense<0.000000e+00> : vector<32x128xf32>
    %2 = tpu.matmul %0, %1, %cst {dimension_numbers = #tpu.dot_dimension_numbers<[1], [0], [0], [1], [0, 0, 1, 1], [], []>} : vector<32x32xf32>, vector<32x128xf32>, vector<32x128xf32> -> vector<32x128xf32>
    %c0_3 = arith.constant 0 : index
    %c0_4 = arith.constant 0 : index
    %3 = vector.load %arg5[%c0_3, %c0_4] : memref<1x128xf32, #tpu.memory_space<vmem>>, vector<1x128xf32>
    %4 = vector.broadcast %3 : vector<1x128xf32> to vector<32x128xf32>
    %5 = arith.addf %2, %4 : vector<32x128xf32>
    %c0_5 = arith.constant 0 : index
    %c0_6 = arith.constant 0 : index
    %6 = vector.load %arg4[%c0_5, %c0_6] : memref<32x128xf32, #tpu.memory_space<vmem>>, vector<32x128xf32>
    %c0_7 = arith.constant 0 : index
    %c0_8 = arith.constant 0 : index
    %7 = vector.load %arg1[%c0_7, %c0_8] : memref<2x32xf32, #tpu.memory_space<vmem>>, vector<2x32xf32>
    %c0_9 = arith.constant 0 : index
    %c0_10 = arith.constant 0 : index
    %8 = vector.load %arg2[%c0_9, %c0_10] : memref<2x32xf32, #tpu.memory_space<vmem>>, vector<2x32xf32>
    %9 = tpu.iota {dimensions = array<i32: 1>} : vector<1x2xi32>
    %cst_11 = arith.constant 0.000000e+00 : f32
    %10 = vector.broadcast %cst_11 : f32 to vector<1x2xf32>
    %11 = vector.extract_strided_slice %5 {offsets = [0, 0], sizes = [2, 128], strides = [1, 1]} : vector<32x128xf32> to vector<2x128xf32>
    %cst_12 = arith.constant dense<0.000000e+00> : vector<2x128xf32>
    %12 = tpu.matmul %7, %6, %cst_12 {dimension_numbers = #tpu.dot_dimension_numbers<[1], [0], [0], [1], [0, 0, 1, 1], [], []>} : vector<2x32xf32>, vector<32x128xf32>, vector<2x128xf32> -> vector<2x128xf32>
    %13 = arith.addf %11, %12 : vector<2x128xf32>
    %14 = vector.extract_strided_slice %13 {offsets = [0, 0], sizes = [2, 96], strides = [1, 1]} : vector<2x128xf32> to vector<2x96xf32>
    %15 = arith.negf %14 : vector<2x96xf32>
    %16 = math.exp %15 : vector<2x96xf32>
    %cst_13 = arith.constant 1.000000e+00 : f32
    %17 = vector.broadcast %cst_13 : f32 to vector<2x96xf32>
    %18 = arith.addf %17, %16 : vector<2x96xf32>
    %19 = arith.divf %17, %18 : vector<2x96xf32>
    %20 = vector.extract_strided_slice %13 {offsets = [0, 96], sizes = [2, 32], strides = [1, 1]} : vector<2x128xf32> to vector<2x32xf32>
    %21 = math.tanh %20 : vector<2x32xf32>
    %22 = vector.extract_strided_slice %19 {offsets = [0, 32], sizes = [2, 32], strides = [1, 1]} : vector<2x96xf32> to vector<2x32xf32>
    %23 = arith.mulf %22, %8 : vector<2x32xf32>
    %24 = vector.extract_strided_slice %19 {offsets = [0, 0], sizes = [2, 32], strides = [1, 1]} : vector<2x96xf32> to vector<2x32xf32>
    %25 = arith.mulf %24, %21 : vector<2x32xf32>
    %26 = arith.addf %23, %25 : vector<2x32xf32>
    %27 = vector.extract_strided_slice %19 {offsets = [0, 64], sizes = [2, 32], strides = [1, 1]} : vector<2x96xf32> to vector<2x32xf32>
    %28 = math.tanh %26 : vector<2x32xf32>
    %29 = arith.mulf %27, %28 : vector<2x32xf32>
    %30 = vector.extract_strided_slice %5 {offsets = [2, 0], sizes = [2, 128], strides = [1, 1]} : vector<32x128xf32> to vector<2x128xf32>
    %cst_14 = arith.constant dense<0.000000e+00> : vector<2x128xf32>
    %31 = tpu.matmul %29, %6, %cst_14 {dimension_numbers = #tpu.dot_dimension_numbers<[1], [0], [0], [1], [0, 0, 1, 1], [], []>} : vector<2x32xf32>, vector<32x128xf32>, vector<2x128xf32> -> vector<2x128xf32>
    %32 = arith.addf %30, %31 : vector<2x128xf32>
    %33 = vector.extract_strided_slice %32 {offsets = [0, 0], sizes = [2, 96], strides = [1, 1]} : vector<2x128xf32> to vector<2x96xf32>
    %34 = arith.negf %33 : vector<2x96xf32>
    %35 = math.exp %34 : vector<2x96xf32>
    %cst_15 = arith.constant 1.000000e+00 : f32
    %36 = vector.broadcast %cst_15 : f32 to vector<2x96xf32>
    %37 = arith.addf %36, %35 : vector<2x96xf32>
    %38 = arith.divf %36, %37 : vector<2x96xf32>
    %39 = vector.extract_strided_slice %32 {offsets = [0, 96], sizes = [2, 32], strides = [1, 1]} : vector<2x128xf32> to vector<2x32xf32>
    %40 = math.tanh %39 : vector<2x32xf32>
    %41 = vector.extract_strided_slice %38 {offsets = [0, 32], sizes = [2, 32], strides = [1, 1]} : vector<2x96xf32> to vector<2x32xf32>
    %42 = arith.mulf %41, %26 : vector<2x32xf32>
    %43 = vector.extract_strided_slice %38 {offsets = [0, 0], sizes = [2, 32], strides = [1, 1]} : vector<2x96xf32> to vector<2x32xf32>
    %44 = arith.mulf %43, %40 : vector<2x32xf32>
    %45 = arith.addf %42, %44 : vector<2x32xf32>
    %46 = vector.extract_strided_slice %38 {offsets = [0, 64], sizes = [2, 32], strides = [1, 1]} : vector<2x96xf32> to vector<2x32xf32>
    %47 = math.tanh %45 : vector<2x32xf32>
    %48 = arith.mulf %46, %47 : vector<2x32xf32>
    %49 = vector.extract_strided_slice %5 {offsets = [4, 0], sizes = [2, 128], strides = [1, 1]} : vector<32x128xf32> to vector<2x128xf32>
    %cst_16 = arith.constant dense<0.000000e+00> : vector<2x128xf32>
    %50 = tpu.matmul %48, %6, %cst_16 {dimension_numbers = #tpu.dot_dimension_numbers<[1], [0], [0], [1], [0, 0, 1, 1], [], []>} : vector<2x32xf32>, vector<32x128xf32>, vector<2x128xf32> -> vector<2x128xf32>
    %51 = arith.addf %49, %50 : vector<2x128xf32>
    %52 = vector.extract_strided_slice %51 {offsets = [0, 0], sizes = [2, 96], strides = [1, 1]} : vector<2x128xf32> to vector<2x96xf32>
    %53 = arith.negf %52 : vector<2x96xf32>
    %54 = math.exp %53 : vector<2x96xf32>
    %cst_17 = arith.constant 1.000000e+00 : f32
    %55 = vector.broadcast %cst_17 : f32 to vector<2x96xf32>
    %56 = arith.addf %55, %54 : vector<2x96xf32>
    %57 = arith.divf %55, %56 : vector<2x96xf32>
    %58 = vector.extract_strided_slice %51 {offsets = [0, 96], sizes = [2, 32], strides = [1, 1]} : vector<2x128xf32> to vector<2x32xf32>
    %59 = math.tanh %58 : vector<2x32xf32>
    %60 = vector.extract_strided_slice %57 {offsets = [0, 32], sizes = [2, 32], strides = [1, 1]} : vector<2x96xf32> to vector<2x32xf32>
    %61 = arith.mulf %60, %45 : vector<2x32xf32>
    %62 = vector.extract_strided_slice %57 {offsets = [0, 0], sizes = [2, 32], strides = [1, 1]} : vector<2x96xf32> to vector<2x32xf32>
    %63 = arith.mulf %62, %59 : vector<2x32xf32>
    %64 = arith.addf %61, %63 : vector<2x32xf32>
    %65 = vector.extract_strided_slice %57 {offsets = [0, 64], sizes = [2, 32], strides = [1, 1]} : vector<2x96xf32> to vector<2x32xf32>
    %66 = math.tanh %64 : vector<2x32xf32>
    %67 = arith.mulf %65, %66 : vector<2x32xf32>
    %68 = vector.extract_strided_slice %5 {offsets = [6, 0], sizes = [2, 128], strides = [1, 1]} : vector<32x128xf32> to vector<2x128xf32>
    %cst_18 = arith.constant dense<0.000000e+00> : vector<2x128xf32>
    %69 = tpu.matmul %67, %6, %cst_18 {dimension_numbers = #tpu.dot_dimension_numbers<[1], [0], [0], [1], [0, 0, 1, 1], [], []>} : vector<2x32xf32>, vector<32x128xf32>, vector<2x128xf32> -> vector<2x128xf32>
    %70 = arith.addf %68, %69 : vector<2x128xf32>
    %71 = vector.extract_strided_slice %70 {offsets = [0, 0], sizes = [2, 96], strides = [1, 1]} : vector<2x128xf32> to vector<2x96xf32>
    %72 = arith.negf %71 : vector<2x96xf32>
    %73 = math.exp %72 : vector<2x96xf32>
    %cst_19 = arith.constant 1.000000e+00 : f32
    %74 = vector.broadcast %cst_19 : f32 to vector<2x96xf32>
    %75 = arith.addf %74, %73 : vector<2x96xf32>
    %76 = arith.divf %74, %75 : vector<2x96xf32>
    %77 = vector.extract_strided_slice %70 {offsets = [0, 96], sizes = [2, 32], strides = [1, 1]} : vector<2x128xf32> to vector<2x32xf32>
    %78 = math.tanh %77 : vector<2x32xf32>
    %79 = vector.extract_strided_slice %76 {offsets = [0, 32], sizes = [2, 32], strides = [1, 1]} : vector<2x96xf32> to vector<2x32xf32>
    %80 = arith.mulf %79, %64 : vector<2x32xf32>
    %81 = vector.extract_strided_slice %76 {offsets = [0, 0], sizes = [2, 32], strides = [1, 1]} : vector<2x96xf32> to vector<2x32xf32>
    %82 = arith.mulf %81, %78 : vector<2x32xf32>
    %83 = arith.addf %80, %82 : vector<2x32xf32>
    %84 = vector.extract_strided_slice %76 {offsets = [0, 64], sizes = [2, 32], strides = [1, 1]} : vector<2x96xf32> to vector<2x32xf32>
    %85 = math.tanh %83 : vector<2x32xf32>
    %86 = arith.mulf %84, %85 : vector<2x32xf32>
    %87 = vector.extract_strided_slice %5 {offsets = [8, 0], sizes = [2, 128], strides = [1, 1]} : vector<32x128xf32> to vector<2x128xf32>
    %cst_20 = arith.constant dense<0.000000e+00> : vector<2x128xf32>
    %88 = tpu.matmul %86, %6, %cst_20 {dimension_numbers = #tpu.dot_dimension_numbers<[1], [0], [0], [1], [0, 0, 1, 1], [], []>} : vector<2x32xf32>, vector<32x128xf32>, vector<2x128xf32> -> vector<2x128xf32>
    %89 = arith.addf %87, %88 : vector<2x128xf32>
    %90 = vector.extract_strided_slice %89 {offsets = [0, 0], sizes = [2, 96], strides = [1, 1]} : vector<2x128xf32> to vector<2x96xf32>
    %91 = arith.negf %90 : vector<2x96xf32>
    %92 = math.exp %91 : vector<2x96xf32>
    %cst_21 = arith.constant 1.000000e+00 : f32
    %93 = vector.broadcast %cst_21 : f32 to vector<2x96xf32>
    %94 = arith.addf %93, %92 : vector<2x96xf32>
    %95 = arith.divf %93, %94 : vector<2x96xf32>
    %96 = vector.extract_strided_slice %89 {offsets = [0, 96], sizes = [2, 32], strides = [1, 1]} : vector<2x128xf32> to vector<2x32xf32>
    %97 = math.tanh %96 : vector<2x32xf32>
    %98 = vector.extract_strided_slice %95 {offsets = [0, 32], sizes = [2, 32], strides = [1, 1]} : vector<2x96xf32> to vector<2x32xf32>
    %99 = arith.mulf %98, %83 : vector<2x32xf32>
    %100 = vector.extract_strided_slice %95 {offsets = [0, 0], sizes = [2, 32], strides = [1, 1]} : vector<2x96xf32> to vector<2x32xf32>
    %101 = arith.mulf %100, %97 : vector<2x32xf32>
    %102 = arith.addf %99, %101 : vector<2x32xf32>
    %103 = vector.extract_strided_slice %95 {offsets = [0, 64], sizes = [2, 32], strides = [1, 1]} : vector<2x96xf32> to vector<2x32xf32>
    %104 = math.tanh %102 : vector<2x32xf32>
    %105 = arith.mulf %103, %104 : vector<2x32xf32>
    %106 = vector.extract_strided_slice %5 {offsets = [10, 0], sizes = [2, 128], strides = [1, 1]} : vector<32x128xf32> to vector<2x128xf32>
    %cst_22 = arith.constant dense<0.000000e+00> : vector<2x128xf32>
    %107 = tpu.matmul %105, %6, %cst_22 {dimension_numbers = #tpu.dot_dimension_numbers<[1], [0], [0], [1], [0, 0, 1, 1], [], []>} : vector<2x32xf32>, vector<32x128xf32>, vector<2x128xf32> -> vector<2x128xf32>
    %108 = arith.addf %106, %107 : vector<2x128xf32>
    %109 = vector.extract_strided_slice %108 {offsets = [0, 0], sizes = [2, 96], strides = [1, 1]} : vector<2x128xf32> to vector<2x96xf32>
    %110 = arith.negf %109 : vector<2x96xf32>
    %111 = math.exp %110 : vector<2x96xf32>
    %cst_23 = arith.constant 1.000000e+00 : f32
    %112 = vector.broadcast %cst_23 : f32 to vector<2x96xf32>
    %113 = arith.addf %112, %111 : vector<2x96xf32>
    %114 = arith.divf %112, %113 : vector<2x96xf32>
    %115 = vector.extract_strided_slice %108 {offsets = [0, 96], sizes = [2, 32], strides = [1, 1]} : vector<2x128xf32> to vector<2x32xf32>
    %116 = math.tanh %115 : vector<2x32xf32>
    %117 = vector.extract_strided_slice %114 {offsets = [0, 32], sizes = [2, 32], strides = [1, 1]} : vector<2x96xf32> to vector<2x32xf32>
    %118 = arith.mulf %117, %102 : vector<2x32xf32>
    %119 = vector.extract_strided_slice %114 {offsets = [0, 0], sizes = [2, 32], strides = [1, 1]} : vector<2x96xf32> to vector<2x32xf32>
    %120 = arith.mulf %119, %116 : vector<2x32xf32>
    %121 = arith.addf %118, %120 : vector<2x32xf32>
    %122 = vector.extract_strided_slice %114 {offsets = [0, 64], sizes = [2, 32], strides = [1, 1]} : vector<2x96xf32> to vector<2x32xf32>
    %123 = math.tanh %121 : vector<2x32xf32>
    %124 = arith.mulf %122, %123 : vector<2x32xf32>
    %125 = vector.extract_strided_slice %5 {offsets = [12, 0], sizes = [2, 128], strides = [1, 1]} : vector<32x128xf32> to vector<2x128xf32>
    %cst_24 = arith.constant dense<0.000000e+00> : vector<2x128xf32>
    %126 = tpu.matmul %124, %6, %cst_24 {dimension_numbers = #tpu.dot_dimension_numbers<[1], [0], [0], [1], [0, 0, 1, 1], [], []>} : vector<2x32xf32>, vector<32x128xf32>, vector<2x128xf32> -> vector<2x128xf32>
    %127 = arith.addf %125, %126 : vector<2x128xf32>
    %128 = vector.extract_strided_slice %127 {offsets = [0, 0], sizes = [2, 96], strides = [1, 1]} : vector<2x128xf32> to vector<2x96xf32>
    %129 = arith.negf %128 : vector<2x96xf32>
    %130 = math.exp %129 : vector<2x96xf32>
    %cst_25 = arith.constant 1.000000e+00 : f32
    %131 = vector.broadcast %cst_25 : f32 to vector<2x96xf32>
    %132 = arith.addf %131, %130 : vector<2x96xf32>
    %133 = arith.divf %131, %132 : vector<2x96xf32>
    %134 = vector.extract_strided_slice %127 {offsets = [0, 96], sizes = [2, 32], strides = [1, 1]} : vector<2x128xf32> to vector<2x32xf32>
    %135 = math.tanh %134 : vector<2x32xf32>
    %136 = vector.extract_strided_slice %133 {offsets = [0, 32], sizes = [2, 32], strides = [1, 1]} : vector<2x96xf32> to vector<2x32xf32>
    %137 = arith.mulf %136, %121 : vector<2x32xf32>
    %138 = vector.extract_strided_slice %133 {offsets = [0, 0], sizes = [2, 32], strides = [1, 1]} : vector<2x96xf32> to vector<2x32xf32>
    %139 = arith.mulf %138, %135 : vector<2x32xf32>
    %140 = arith.addf %137, %139 : vector<2x32xf32>
    %141 = vector.extract_strided_slice %133 {offsets = [0, 64], sizes = [2, 32], strides = [1, 1]} : vector<2x96xf32> to vector<2x32xf32>
    %142 = math.tanh %140 : vector<2x32xf32>
    %143 = arith.mulf %141, %142 : vector<2x32xf32>
    %144 = vector.extract_strided_slice %5 {offsets = [14, 0], sizes = [2, 128], strides = [1, 1]} : vector<32x128xf32> to vector<2x128xf32>
    %cst_26 = arith.constant dense<0.000000e+00> : vector<2x128xf32>
    %145 = tpu.matmul %143, %6, %cst_26 {dimension_numbers = #tpu.dot_dimension_numbers<[1], [0], [0], [1], [0, 0, 1, 1], [], []>} : vector<2x32xf32>, vector<32x128xf32>, vector<2x128xf32> -> vector<2x128xf32>
    %146 = arith.addf %144, %145 : vector<2x128xf32>
    %147 = vector.extract_strided_slice %146 {offsets = [0, 0], sizes = [2, 96], strides = [1, 1]} : vector<2x128xf32> to vector<2x96xf32>
    %148 = arith.negf %147 : vector<2x96xf32>
    %149 = math.exp %148 : vector<2x96xf32>
    %cst_27 = arith.constant 1.000000e+00 : f32
    %150 = vector.broadcast %cst_27 : f32 to vector<2x96xf32>
    %151 = arith.addf %150, %149 : vector<2x96xf32>
    %152 = arith.divf %150, %151 : vector<2x96xf32>
    %153 = vector.extract_strided_slice %146 {offsets = [0, 96], sizes = [2, 32], strides = [1, 1]} : vector<2x128xf32> to vector<2x32xf32>
    %154 = math.tanh %153 : vector<2x32xf32>
    %155 = vector.extract_strided_slice %152 {offsets = [0, 32], sizes = [2, 32], strides = [1, 1]} : vector<2x96xf32> to vector<2x32xf32>
    %156 = arith.mulf %155, %140 : vector<2x32xf32>
    %157 = vector.extract_strided_slice %152 {offsets = [0, 0], sizes = [2, 32], strides = [1, 1]} : vector<2x96xf32> to vector<2x32xf32>
    %158 = arith.mulf %157, %154 : vector<2x32xf32>
    %159 = arith.addf %156, %158 : vector<2x32xf32>
    %160 = vector.extract_strided_slice %152 {offsets = [0, 64], sizes = [2, 32], strides = [1, 1]} : vector<2x96xf32> to vector<2x32xf32>
    %161 = math.tanh %159 : vector<2x32xf32>
    %162 = arith.mulf %160, %161 : vector<2x32xf32>
    %163 = vector.extract_strided_slice %162 {offsets = [0, 0], sizes = [1, 32], strides = [1, 1]} : vector<2x32xf32> to vector<1x32xf32>
    %164 = vector.extract_strided_slice %162 {offsets = [1, 0], sizes = [1, 32], strides = [1, 1]} : vector<2x32xf32> to vector<1x32xf32>
    %165 = arith.subf %163, %164 : vector<1x32xf32>
    %166 = math.absf %165 : vector<1x32xf32>
    %cst_28 = arith.constant dense<0.000000e+00> : vector<1xf32>
    %167 = vector.multi_reduction <add>, %166, %cst_28 [1] : vector<1x32xf32> to vector<1xf32>
    %168 = vector.shape_cast %167 : vector<1xf32> to vector<1x1xf32>
    %c0_i32 = arith.constant 0 : i32
    %169 = vector.broadcast %c0_i32 : i32 to vector<1x2xi32>
    %170 = arith.cmpi eq, %9, %169 : vector<1x2xi32>
    %cst_29 = arith.constant 0.000000e+00 : f32
    %171 = vector.broadcast %cst_29 : f32 to vector<1x1xf32>
    %172 = arith.subf %171, %168 : vector<1x1xf32>
    %173 = math.exp %172 : vector<1x1xf32>
    %174 = vector.shape_cast %173 : vector<1x1xf32> to vector<1x1xf32>
    %175 = vector.broadcast %174 : vector<1x1xf32> to vector<1x2xf32>
    %176 = arith.select %170, %175, %10 : vector<1x2xi1>, vector<1x2xf32>
    %177 = vector.extract_strided_slice %5 {offsets = [16, 0], sizes = [2, 128], strides = [1, 1]} : vector<32x128xf32> to vector<2x128xf32>
    %cst_30 = arith.constant dense<0.000000e+00> : vector<2x128xf32>
    %178 = tpu.matmul %162, %6, %cst_30 {dimension_numbers = #tpu.dot_dimension_numbers<[1], [0], [0], [1], [0, 0, 1, 1], [], []>} : vector<2x32xf32>, vector<32x128xf32>, vector<2x128xf32> -> vector<2x128xf32>
    %179 = arith.addf %177, %178 : vector<2x128xf32>
    %180 = vector.extract_strided_slice %179 {offsets = [0, 0], sizes = [2, 96], strides = [1, 1]} : vector<2x128xf32> to vector<2x96xf32>
    %181 = arith.negf %180 : vector<2x96xf32>
    %182 = math.exp %181 : vector<2x96xf32>
    %cst_31 = arith.constant 1.000000e+00 : f32
    %183 = vector.broadcast %cst_31 : f32 to vector<2x96xf32>
    %184 = arith.addf %183, %182 : vector<2x96xf32>
    %185 = arith.divf %183, %184 : vector<2x96xf32>
    %186 = vector.extract_strided_slice %179 {offsets = [0, 96], sizes = [2, 32], strides = [1, 1]} : vector<2x128xf32> to vector<2x32xf32>
    %187 = math.tanh %186 : vector<2x32xf32>
    %188 = vector.extract_strided_slice %185 {offsets = [0, 32], sizes = [2, 32], strides = [1, 1]} : vector<2x96xf32> to vector<2x32xf32>
    %189 = arith.mulf %188, %159 : vector<2x32xf32>
    %190 = vector.extract_strided_slice %185 {offsets = [0, 0], sizes = [2, 32], strides = [1, 1]} : vector<2x96xf32> to vector<2x32xf32>
    %191 = arith.mulf %190, %187 : vector<2x32xf32>
    %192 = arith.addf %189, %191 : vector<2x32xf32>
    %193 = vector.extract_strided_slice %185 {offsets = [0, 64], sizes = [2, 32], strides = [1, 1]} : vector<2x96xf32> to vector<2x32xf32>
    %194 = math.tanh %192 : vector<2x32xf32>
    %195 = arith.mulf %193, %194 : vector<2x32xf32>
    %196 = vector.extract_strided_slice %5 {offsets = [18, 0], sizes = [2, 128], strides = [1, 1]} : vector<32x128xf32> to vector<2x128xf32>
    %cst_32 = arith.constant dense<0.000000e+00> : vector<2x128xf32>
    %197 = tpu.matmul %195, %6, %cst_32 {dimension_numbers = #tpu.dot_dimension_numbers<[1], [0], [0], [1], [0, 0, 1, 1], [], []>} : vector<2x32xf32>, vector<32x128xf32>, vector<2x128xf32> -> vector<2x128xf32>
    %198 = arith.addf %196, %197 : vector<2x128xf32>
    %199 = vector.extract_strided_slice %198 {offsets = [0, 0], sizes = [2, 96], strides = [1, 1]} : vector<2x128xf32> to vector<2x96xf32>
    %200 = arith.negf %199 : vector<2x96xf32>
    %201 = math.exp %200 : vector<2x96xf32>
    %cst_33 = arith.constant 1.000000e+00 : f32
    %202 = vector.broadcast %cst_33 : f32 to vector<2x96xf32>
    %203 = arith.addf %202, %201 : vector<2x96xf32>
    %204 = arith.divf %202, %203 : vector<2x96xf32>
    %205 = vector.extract_strided_slice %198 {offsets = [0, 96], sizes = [2, 32], strides = [1, 1]} : vector<2x128xf32> to vector<2x32xf32>
    %206 = math.tanh %205 : vector<2x32xf32>
    %207 = vector.extract_strided_slice %204 {offsets = [0, 32], sizes = [2, 32], strides = [1, 1]} : vector<2x96xf32> to vector<2x32xf32>
    %208 = arith.mulf %207, %192 : vector<2x32xf32>
    %209 = vector.extract_strided_slice %204 {offsets = [0, 0], sizes = [2, 32], strides = [1, 1]} : vector<2x96xf32> to vector<2x32xf32>
    %210 = arith.mulf %209, %206 : vector<2x32xf32>
    %211 = arith.addf %208, %210 : vector<2x32xf32>
    %212 = vector.extract_strided_slice %204 {offsets = [0, 64], sizes = [2, 32], strides = [1, 1]} : vector<2x96xf32> to vector<2x32xf32>
    %213 = math.tanh %211 : vector<2x32xf32>
    %214 = arith.mulf %212, %213 : vector<2x32xf32>
    %215 = vector.extract_strided_slice %5 {offsets = [20, 0], sizes = [2, 128], strides = [1, 1]} : vector<32x128xf32> to vector<2x128xf32>
    %cst_34 = arith.constant dense<0.000000e+00> : vector<2x128xf32>
    %216 = tpu.matmul %214, %6, %cst_34 {dimension_numbers = #tpu.dot_dimension_numbers<[1], [0], [0], [1], [0, 0, 1, 1], [], []>} : vector<2x32xf32>, vector<32x128xf32>, vector<2x128xf32> -> vector<2x128xf32>
    %217 = arith.addf %215, %216 : vector<2x128xf32>
    %218 = vector.extract_strided_slice %217 {offsets = [0, 0], sizes = [2, 96], strides = [1, 1]} : vector<2x128xf32> to vector<2x96xf32>
    %219 = arith.negf %218 : vector<2x96xf32>
    %220 = math.exp %219 : vector<2x96xf32>
    %cst_35 = arith.constant 1.000000e+00 : f32
    %221 = vector.broadcast %cst_35 : f32 to vector<2x96xf32>
    %222 = arith.addf %221, %220 : vector<2x96xf32>
    %223 = arith.divf %221, %222 : vector<2x96xf32>
    %224 = vector.extract_strided_slice %217 {offsets = [0, 96], sizes = [2, 32], strides = [1, 1]} : vector<2x128xf32> to vector<2x32xf32>
    %225 = math.tanh %224 : vector<2x32xf32>
    %226 = vector.extract_strided_slice %223 {offsets = [0, 32], sizes = [2, 32], strides = [1, 1]} : vector<2x96xf32> to vector<2x32xf32>
    %227 = arith.mulf %226, %211 : vector<2x32xf32>
    %228 = vector.extract_strided_slice %223 {offsets = [0, 0], sizes = [2, 32], strides = [1, 1]} : vector<2x96xf32> to vector<2x32xf32>
    %229 = arith.mulf %228, %225 : vector<2x32xf32>
    %230 = arith.addf %227, %229 : vector<2x32xf32>
    %231 = vector.extract_strided_slice %223 {offsets = [0, 64], sizes = [2, 32], strides = [1, 1]} : vector<2x96xf32> to vector<2x32xf32>
    %232 = math.tanh %230 : vector<2x32xf32>
    %233 = arith.mulf %231, %232 : vector<2x32xf32>
    %234 = vector.extract_strided_slice %5 {offsets = [22, 0], sizes = [2, 128], strides = [1, 1]} : vector<32x128xf32> to vector<2x128xf32>
    %cst_36 = arith.constant dense<0.000000e+00> : vector<2x128xf32>
    %235 = tpu.matmul %233, %6, %cst_36 {dimension_numbers = #tpu.dot_dimension_numbers<[1], [0], [0], [1], [0, 0, 1, 1], [], []>} : vector<2x32xf32>, vector<32x128xf32>, vector<2x128xf32> -> vector<2x128xf32>
    %236 = arith.addf %234, %235 : vector<2x128xf32>
    %237 = vector.extract_strided_slice %236 {offsets = [0, 0], sizes = [2, 96], strides = [1, 1]} : vector<2x128xf32> to vector<2x96xf32>
    %238 = arith.negf %237 : vector<2x96xf32>
    %239 = math.exp %238 : vector<2x96xf32>
    %cst_37 = arith.constant 1.000000e+00 : f32
    %240 = vector.broadcast %cst_37 : f32 to vector<2x96xf32>
    %241 = arith.addf %240, %239 : vector<2x96xf32>
    %242 = arith.divf %240, %241 : vector<2x96xf32>
    %243 = vector.extract_strided_slice %236 {offsets = [0, 96], sizes = [2, 32], strides = [1, 1]} : vector<2x128xf32> to vector<2x32xf32>
    %244 = math.tanh %243 : vector<2x32xf32>
    %245 = vector.extract_strided_slice %242 {offsets = [0, 32], sizes = [2, 32], strides = [1, 1]} : vector<2x96xf32> to vector<2x32xf32>
    %246 = arith.mulf %245, %230 : vector<2x32xf32>
    %247 = vector.extract_strided_slice %242 {offsets = [0, 0], sizes = [2, 32], strides = [1, 1]} : vector<2x96xf32> to vector<2x32xf32>
    %248 = arith.mulf %247, %244 : vector<2x32xf32>
    %249 = arith.addf %246, %248 : vector<2x32xf32>
    %250 = vector.extract_strided_slice %242 {offsets = [0, 64], sizes = [2, 32], strides = [1, 1]} : vector<2x96xf32> to vector<2x32xf32>
    %251 = math.tanh %249 : vector<2x32xf32>
    %252 = arith.mulf %250, %251 : vector<2x32xf32>
    %253 = vector.extract_strided_slice %5 {offsets = [24, 0], sizes = [2, 128], strides = [1, 1]} : vector<32x128xf32> to vector<2x128xf32>
    %cst_38 = arith.constant dense<0.000000e+00> : vector<2x128xf32>
    %254 = tpu.matmul %252, %6, %cst_38 {dimension_numbers = #tpu.dot_dimension_numbers<[1], [0], [0], [1], [0, 0, 1, 1], [], []>} : vector<2x32xf32>, vector<32x128xf32>, vector<2x128xf32> -> vector<2x128xf32>
    %255 = arith.addf %253, %254 : vector<2x128xf32>
    %256 = vector.extract_strided_slice %255 {offsets = [0, 0], sizes = [2, 96], strides = [1, 1]} : vector<2x128xf32> to vector<2x96xf32>
    %257 = arith.negf %256 : vector<2x96xf32>
    %258 = math.exp %257 : vector<2x96xf32>
    %cst_39 = arith.constant 1.000000e+00 : f32
    %259 = vector.broadcast %cst_39 : f32 to vector<2x96xf32>
    %260 = arith.addf %259, %258 : vector<2x96xf32>
    %261 = arith.divf %259, %260 : vector<2x96xf32>
    %262 = vector.extract_strided_slice %255 {offsets = [0, 96], sizes = [2, 32], strides = [1, 1]} : vector<2x128xf32> to vector<2x32xf32>
    %263 = math.tanh %262 : vector<2x32xf32>
    %264 = vector.extract_strided_slice %261 {offsets = [0, 32], sizes = [2, 32], strides = [1, 1]} : vector<2x96xf32> to vector<2x32xf32>
    %265 = arith.mulf %264, %249 : vector<2x32xf32>
    %266 = vector.extract_strided_slice %261 {offsets = [0, 0], sizes = [2, 32], strides = [1, 1]} : vector<2x96xf32> to vector<2x32xf32>
    %267 = arith.mulf %266, %263 : vector<2x32xf32>
    %268 = arith.addf %265, %267 : vector<2x32xf32>
    %269 = vector.extract_strided_slice %261 {offsets = [0, 64], sizes = [2, 32], strides = [1, 1]} : vector<2x96xf32> to vector<2x32xf32>
    %270 = math.tanh %268 : vector<2x32xf32>
    %271 = arith.mulf %269, %270 : vector<2x32xf32>
    %272 = vector.extract_strided_slice %5 {offsets = [26, 0], sizes = [2, 128], strides = [1, 1]} : vector<32x128xf32> to vector<2x128xf32>
    %cst_40 = arith.constant dense<0.000000e+00> : vector<2x128xf32>
    %273 = tpu.matmul %271, %6, %cst_40 {dimension_numbers = #tpu.dot_dimension_numbers<[1], [0], [0], [1], [0, 0, 1, 1], [], []>} : vector<2x32xf32>, vector<32x128xf32>, vector<2x128xf32> -> vector<2x128xf32>
    %274 = arith.addf %272, %273 : vector<2x128xf32>
    %275 = vector.extract_strided_slice %274 {offsets = [0, 0], sizes = [2, 96], strides = [1, 1]} : vector<2x128xf32> to vector<2x96xf32>
    %276 = arith.negf %275 : vector<2x96xf32>
    %277 = math.exp %276 : vector<2x96xf32>
    %cst_41 = arith.constant 1.000000e+00 : f32
    %278 = vector.broadcast %cst_41 : f32 to vector<2x96xf32>
    %279 = arith.addf %278, %277 : vector<2x96xf32>
    %280 = arith.divf %278, %279 : vector<2x96xf32>
    %281 = vector.extract_strided_slice %274 {offsets = [0, 96], sizes = [2, 32], strides = [1, 1]} : vector<2x128xf32> to vector<2x32xf32>
    %282 = math.tanh %281 : vector<2x32xf32>
    %283 = vector.extract_strided_slice %280 {offsets = [0, 32], sizes = [2, 32], strides = [1, 1]} : vector<2x96xf32> to vector<2x32xf32>
    %284 = arith.mulf %283, %268 : vector<2x32xf32>
    %285 = vector.extract_strided_slice %280 {offsets = [0, 0], sizes = [2, 32], strides = [1, 1]} : vector<2x96xf32> to vector<2x32xf32>
    %286 = arith.mulf %285, %282 : vector<2x32xf32>
    %287 = arith.addf %284, %286 : vector<2x32xf32>
    %288 = vector.extract_strided_slice %280 {offsets = [0, 64], sizes = [2, 32], strides = [1, 1]} : vector<2x96xf32> to vector<2x32xf32>
    %289 = math.tanh %287 : vector<2x32xf32>
    %290 = arith.mulf %288, %289 : vector<2x32xf32>
    %291 = vector.extract_strided_slice %5 {offsets = [28, 0], sizes = [2, 128], strides = [1, 1]} : vector<32x128xf32> to vector<2x128xf32>
    %cst_42 = arith.constant dense<0.000000e+00> : vector<2x128xf32>
    %292 = tpu.matmul %290, %6, %cst_42 {dimension_numbers = #tpu.dot_dimension_numbers<[1], [0], [0], [1], [0, 0, 1, 1], [], []>} : vector<2x32xf32>, vector<32x128xf32>, vector<2x128xf32> -> vector<2x128xf32>
    %293 = arith.addf %291, %292 : vector<2x128xf32>
    %294 = vector.extract_strided_slice %293 {offsets = [0, 0], sizes = [2, 96], strides = [1, 1]} : vector<2x128xf32> to vector<2x96xf32>
    %295 = arith.negf %294 : vector<2x96xf32>
    %296 = math.exp %295 : vector<2x96xf32>
    %cst_43 = arith.constant 1.000000e+00 : f32
    %297 = vector.broadcast %cst_43 : f32 to vector<2x96xf32>
    %298 = arith.addf %297, %296 : vector<2x96xf32>
    %299 = arith.divf %297, %298 : vector<2x96xf32>
    %300 = vector.extract_strided_slice %293 {offsets = [0, 96], sizes = [2, 32], strides = [1, 1]} : vector<2x128xf32> to vector<2x32xf32>
    %301 = math.tanh %300 : vector<2x32xf32>
    %302 = vector.extract_strided_slice %299 {offsets = [0, 32], sizes = [2, 32], strides = [1, 1]} : vector<2x96xf32> to vector<2x32xf32>
    %303 = arith.mulf %302, %287 : vector<2x32xf32>
    %304 = vector.extract_strided_slice %299 {offsets = [0, 0], sizes = [2, 32], strides = [1, 1]} : vector<2x96xf32> to vector<2x32xf32>
    %305 = arith.mulf %304, %301 : vector<2x32xf32>
    %306 = arith.addf %303, %305 : vector<2x32xf32>
    %307 = vector.extract_strided_slice %299 {offsets = [0, 64], sizes = [2, 32], strides = [1, 1]} : vector<2x96xf32> to vector<2x32xf32>
    %308 = math.tanh %306 : vector<2x32xf32>
    %309 = arith.mulf %307, %308 : vector<2x32xf32>
    %310 = vector.extract_strided_slice %5 {offsets = [30, 0], sizes = [2, 128], strides = [1, 1]} : vector<32x128xf32> to vector<2x128xf32>
    %cst_44 = arith.constant dense<0.000000e+00> : vector<2x128xf32>
    %311 = tpu.matmul %309, %6, %cst_44 {dimension_numbers = #tpu.dot_dimension_numbers<[1], [0], [0], [1], [0, 0, 1, 1], [], []>} : vector<2x32xf32>, vector<32x128xf32>, vector<2x128xf32> -> vector<2x128xf32>
    %312 = arith.addf %310, %311 : vector<2x128xf32>
    %313 = vector.extract_strided_slice %312 {offsets = [0, 0], sizes = [2, 96], strides = [1, 1]} : vector<2x128xf32> to vector<2x96xf32>
    %314 = arith.negf %313 : vector<2x96xf32>
    %315 = math.exp %314 : vector<2x96xf32>
    %cst_45 = arith.constant 1.000000e+00 : f32
    %316 = vector.broadcast %cst_45 : f32 to vector<2x96xf32>
    %317 = arith.addf %316, %315 : vector<2x96xf32>
    %318 = arith.divf %316, %317 : vector<2x96xf32>
    %319 = vector.extract_strided_slice %312 {offsets = [0, 96], sizes = [2, 32], strides = [1, 1]} : vector<2x128xf32> to vector<2x32xf32>
    %320 = math.tanh %319 : vector<2x32xf32>
    %321 = vector.extract_strided_slice %318 {offsets = [0, 32], sizes = [2, 32], strides = [1, 1]} : vector<2x96xf32> to vector<2x32xf32>
    %322 = arith.mulf %321, %306 : vector<2x32xf32>
    %323 = vector.extract_strided_slice %318 {offsets = [0, 0], sizes = [2, 32], strides = [1, 1]} : vector<2x96xf32> to vector<2x32xf32>
    %324 = arith.mulf %323, %320 : vector<2x32xf32>
    %325 = arith.addf %322, %324 : vector<2x32xf32>
    %326 = vector.extract_strided_slice %318 {offsets = [0, 64], sizes = [2, 32], strides = [1, 1]} : vector<2x96xf32> to vector<2x32xf32>
    %327 = math.tanh %325 : vector<2x32xf32>
    %328 = arith.mulf %326, %327 : vector<2x32xf32>
    %329 = vector.extract_strided_slice %328 {offsets = [0, 0], sizes = [1, 32], strides = [1, 1]} : vector<2x32xf32> to vector<1x32xf32>
    %330 = vector.extract_strided_slice %328 {offsets = [1, 0], sizes = [1, 32], strides = [1, 1]} : vector<2x32xf32> to vector<1x32xf32>
    %331 = arith.subf %329, %330 : vector<1x32xf32>
    %332 = math.absf %331 : vector<1x32xf32>
    %cst_46 = arith.constant dense<0.000000e+00> : vector<1xf32>
    %333 = vector.multi_reduction <add>, %332, %cst_46 [1] : vector<1x32xf32> to vector<1xf32>
    %334 = vector.shape_cast %333 : vector<1xf32> to vector<1x1xf32>
    %c1_i32 = arith.constant 1 : i32
    %335 = vector.broadcast %c1_i32 : i32 to vector<1x2xi32>
    %336 = arith.cmpi eq, %9, %335 : vector<1x2xi32>
    %cst_47 = arith.constant 0.000000e+00 : f32
    %337 = vector.broadcast %cst_47 : f32 to vector<1x1xf32>
    %338 = arith.subf %337, %334 : vector<1x1xf32>
    %339 = math.exp %338 : vector<1x1xf32>
    %340 = vector.shape_cast %339 : vector<1x1xf32> to vector<1x1xf32>
    %341 = vector.broadcast %340 : vector<1x1xf32> to vector<1x2xf32>
    %342 = arith.select %336, %341, %176 : vector<1x2xi1>, vector<1x2xf32>
    %c0_48 = arith.constant 0 : index
    %c0_49 = arith.constant 0 : index
    %343 = vector.load %arg6[%c0_48, %c0_49] : memref<1x2xf32, #tpu.memory_space<vmem>>, vector<1x2xf32>
    tpu.vector_store %arg6[%c0_48, %c0_49], %342 {strides = array<i32>} : memref<1x2xf32, #tpu.memory_space<vmem>>, vector<1x2xf32>,
    return
  }
}

</mosaic_0001>

<llo_original>
// kernel: tpu_custom_call.1
$region0: #{tpu_custom_call.1}
  #allocation0 [shape = 'u32[]', space=smem, size = 0x4, offset = 0x4, fixed_abs, tag = 'smem constant byte address 0x4 - core index']
  #allocation1 [shape = 'u32[144,128]{1,0:T(1,128)}', space=vmem, size = 0x12000, scoped, tag = 'internal scratch']
  %s0 = inlined_call_operand.hbm [shape: f32[32,32], index: 0, kind: input, shape index: {}]
  %s1 = inlined_call_operand.hbm [shape: f32[2,32], index: 1, kind: input, shape index: {}]
  %s2 = inlined_call_operand.vmem [shape: f32[2,32], index: 2, kind: input, shape index: {}]
  %s3 = inlined_call_operand.hbm [shape: f32[32,128], index: 3, kind: input, shape index: {}]
  %s4 = inlined_call_operand.hbm [shape: f32[32,128], index: 4, kind: input, shape index: {}]
  %s5 = inlined_call_operand.vmem [shape: f32[1,128], index: 5, kind: input, shape index: {}]
  %s6 = inlined_call_operand.hbm [shape: f32[1,2], index: 6, kind: output, shape index: {}]
  %s7 = sld [smem:[#allocation0]]
  $region50: #{tpu_custom_call.1} parent=0
    _
  %s9 = ssub.s32 1, %s7
  %s10 = scalar_select 0, %s9, %s7
  $region1: #{tpu_custom_call.1} parent=0
    #allocation2 [shape = 'u8[16384]{0}', space=vmem, size = 0x4000, scoped, tag = 'input window, operand 0, single buffered']
    #allocation3 [shape = 's32[1]{0}', space=sflag, size = 0x4, scoped, tag = 'scoped memory for tpu_custom_call.1']
    #allocation4 [shape = 's32[1]{0}', space=sflag, size = 0x4, scoped, tag = 'scoped memory for tpu_custom_call.1']
    #allocation5 [shape = 'u8[1024]{0}', space=vmem, size = 0x400, scoped, tag = 'input window, operand 1, single buffered']
    #allocation6 [shape = 's32[1]{0}', space=sflag, size = 0x4, scoped, tag = 'scoped memory for tpu_custom_call.1']
    #allocation7 [shape = 'u8[16384]{0}', space=vmem, size = 0x4000, scoped, tag = 'input window, operand 3, single buffered']
    #allocation8 [shape = 'u8[16384]{0}', space=vmem, size = 0x4000, scoped, tag = 'input window, operand 4, single buffered']
    #allocation9 [shape = 's32[1]{0}', space=sflag, size = 0x4, scoped, tag = 'scoped memory for tpu_custom_call.1']
    #allocation10 [shape = 'u8[512]{0}', space=vmem, size = 0x400, scoped, tag = 'output window, operand 0, single buffered']
    %11 = vsyncpa [#allocation3], 0
    %12 = vsyncpa [#allocation6], 0
    %13 = vsyncpa [#allocation9], 0
    %14 = vsyncpa [#allocation4], 0
    // Predicated region
    $region2: #{tpu_custom_call.1} parent=1 // pred_check
      _
    $region3: #{tpu_custom_call.1} parent=1 // pred_check_branch
      %16 = sbr.rel (0) target = $region5
    $region4: #{tpu_custom_call.1} parent=1 // pred_region
      %s18 = ssub.s32 512, 512
      %19 = vsyncadd [#allocation3], %s18
      %s20 = sshll.u32 [#allocation2], 4
      %s21 = int_to_ptr.vmem [resolvable:$true] %s20
      %26 = dma.hbm_to_vmem [thread:$0]  %s0, 512, %s21, [#allocation3], 128, 128, 8
    $region5: #{tpu_custom_call.1} parent=1 // pred_fallthru
      _
    // Predicated region
    $region6: #{tpu_custom_call.1} parent=1 // pred_check
      _
    $region7: #{tpu_custom_call.1} parent=1 // pred_check_branch
      %28 = sbr.rel (0) target = $region9
    $region8: #{tpu_custom_call.1} parent=1 // pred_region
      %s30 = ssub.s32 32, 32
      %31 = vsyncadd [#allocation6], %s30
      %s33 = sshll.u32 [#allocation5], 4
      %s34 = int_to_ptr.vmem [resolvable:$true] %s33
      %36 = dma.hbm_to_vmem [thread:$0]  %s1, 32, %s34, [#allocation6]
    $region9: #{tpu_custom_call.1} parent=1 // pred_fallthru
      _
    // Predicated region
    $region10: #{tpu_custom_call.1} parent=1 // pred_check
      _
    $region11: #{tpu_custom_call.1} parent=1 // pred_check_branch
      %38 = sbr.rel (0) target = $region13
    $region12: #{tpu_custom_call.1} parent=1 // pred_region
      _
    $region13: #{tpu_custom_call.1} parent=1 // pred_fallthru
      _
    // Predicated region
    $region14: #{tpu_custom_call.1} parent=1 // pred_check
      _
    $region15: #{tpu_custom_call.1} parent=1 // pred_check_branch
      %40 = sbr.rel (0) target = $region17
    $region16: #{tpu_custom_call.1} parent=1 // pred_region
      %s42 = ssub.s32 512, 512
      %43 = vsyncadd [#allocation6], %s42
      %s44 = sshll.u32 [#allocation7], 4
      %s45 = int_to_ptr.vmem [resolvable:$true] %s44
      %50 = dma.hbm_to_vmem [thread:$0]  %s3, 512, %s45, [#allocation6], 128, 128, 8
    $region17: #{tpu_custom_call.1} parent=1 // pred_fallthru
      _
    // Predicated region
    $region18: #{tpu_custom_call.1} parent=1 // pred_check
      _
    $region19: #{tpu_custom_call.1} parent=1 // pred_check_branch
      %52 = sbr.rel (0) target = $region21
    $region20: #{tpu_custom_call.1} parent=1 // pred_region
      %s54 = ssub.s32 512, 512
      %55 = vsyncadd [#allocation9], %s54
      %s56 = sshll.u32 [#allocation8], 4
      %s57 = int_to_ptr.vmem [resolvable:$true] %s56
      %62 = dma.hbm_to_vmem [thread:$0]  %s4, 512, %s57, [#allocation9], 128, 128, 8
    $region21: #{tpu_custom_call.1} parent=1 // pred_fallthru
      _
    // Predicated region
    $region22: #{tpu_custom_call.1} parent=1 // pred_check
      _
    $region23: #{tpu_custom_call.1} parent=1 // pred_check_branch
      %64 = sbr.rel (0) target = $region25
    $region24: #{tpu_custom_call.1} parent=1 // pred_region
      _
    $region25: #{tpu_custom_call.1} parent=1 // pred_fallthru
      _
    // Predicated region
    $region26: #{tpu_custom_call.1} parent=1 // pred_check
      _
    $region27: #{tpu_custom_call.1} parent=1 // pred_check_branch
      %66 = sbr.rel (0) target = $region29
    $region28: #{tpu_custom_call.1} parent=1 // pred_region
      %67 = dma.done [#allocation3], 512
    $region29: #{tpu_custom_call.1} parent=1 // pred_fallthru
      _
    // Predicated region
    $region30: #{tpu_custom_call.1} parent=1 // pred_check
      _
    $region31: #{tpu_custom_call.1} parent=1 // pred_check_branch
      %69 = sbr.rel (0) target = $region33
    $region32: #{tpu_custom_call.1} parent=1 // pred_region
      %70 = dma.done [#allocation6], 32
    $region33: #{tpu_custom_call.1} parent=1 // pred_fallthru
      _
    // Predicated region
    $region34: #{tpu_custom_call.1} parent=1 // pred_check
      _
    $region35: #{tpu_custom_call.1} parent=1 // pred_check_branch
      %72 = sbr.rel (0) target = $region37
    $region36: #{tpu_custom_call.1} parent=1 // pred_region
      %73 = dma.done [#allocation6], 512
    $region37: #{tpu_custom_call.1} parent=1 // pred_fallthru
      _
    // Predicated region
    $region38: #{tpu_custom_call.1} parent=1 // pred_check
      _
    $region39: #{tpu_custom_call.1} parent=1 // pred_check_branch
      %75 = sbr.rel (0) target = $region41
    $region40: #{tpu_custom_call.1} parent=1 // pred_region
      %76 = dma.done [#allocation9], 512
    $region41: #{tpu_custom_call.1} parent=1 // pred_fallthru
      _
    %v77 = vld [vmem:[#allocation2] sm:$0xff]
    %v78 = vld [vmem:[#allocation2 + $0x8] sm:$0xff]
    %v79 = vld [vmem:[#allocation2 + $0x10] sm:$0xff]
    %v80 = vld [vmem:[#allocation2 + $0x18] sm:$0xff]
    %v81 = vld [vmem:[#allocation7] sm:$0xff]
    %v82 = vld [vmem:[#allocation7 + $0x8] sm:$0xff]
    %v83 = vld [vmem:[#allocation7 + $0x10] sm:$0xff]
    %v84 = vld [vmem:[#allocation7 + $0x18] sm:$0xff]
    %v85 = vld [vmem:[%s5] sm:$0x1]
    %v87 = vlaneseq
    %v88 = vshrl.u32 %v87, 7
    %v89 = vsub.s32 0, %v88
    %v90 = vrot.slane %v85, %v89
    %vm92 = vcmask 261120
    %v94 = vsel %vm92, %v77, 0
    %v97 = vsel %vm92, %v78, 0
    %v100 = vsel %vm92, %v79, 0
    %v103 = vsel %vm92, %v80, 0
    %105 = vmatprep.subr.mxu0 0.0
    %106 = vmatpush1.msra.mxu0 0.0
    %107 = vmatprep.subr.mxu0 0.0
    %108 = vmatpush1.msra.mxu0 0.0
    %109 = vmatprep.subr.mxu0 0.0
    %110 = vmatpush1.msra.mxu0 0.0
    %111 = vmatprep.subr.mxu0 0.0
    %112 = vmatpush1.msra.mxu0 0.0
    %113 = vmatprep.subr.mxu0 0.0
    %114 = vmatpush1.msra.mxu0 0.0
    %115 = vmatprep.subr.mxu0 0.0
    %116 = vmatpush1.msra.mxu0 0.0
    %117 = vmatprep.subr.mxu0 0.0
    %118 = vmatpush1.msra.mxu0 0.0
    %119 = vmatprep.subr.mxu0 0.0
    %120 = vmatpush1.msra.mxu0 0.0
    %121 = vmatprep.subr.mxu0 0.0
    %122 = vmatpush1.msra.mxu0 0.0
    %123 = vmatprep.subr.mxu0 0.0
    %124 = vmatpush1.msra.mxu0 0.0
    %125 = vmatprep.subr.mxu0 0.0
    %126 = vmatpush1.msra.mxu0 0.0
    %127 = vmatprep.subr.mxu0 0.0
    %128 = vmatpush1.msra.mxu0 0.0
    %129 = vmatprep.subr.mxu0 0.0
    %130 = vmatpush1.msra.mxu0 %v84
    %131 = vmatprep.subr.mxu0 0.0
    %132 = vmatpush1.msra.mxu0 %v83
    %133 = vmatprep.subr.mxu0 0.0
    %134 = vmatpush1.msra.mxu0 %v82
    %135 = vmatprep.subr.mxu0 0.0
    %136 = vmatpush1.msra.mxu0 %v81
    %137 = vmatprep.subr.mxu0 0.0
    %138 = vmatpush2.msra.mxu0 0.0
    %139 = vmatprep.subr.mxu0 0.0
    %140 = vmatpush2.msra.mxu0 0.0
    %141 = vmatprep.subr.mxu0 0.0
    %142 = vmatpush2.msra.mxu0 0.0
    %143 = vmatprep.subr.mxu0 0.0
    %144 = vmatpush2.msra.mxu0 0.0
    %145 = vmatprep.subr.mxu0 0.0
    %146 = vmatpush2.msra.mxu0 0.0
    %147 = vmatprep.subr.mxu0 0.0
    %148 = vmatpush2.msra.mxu0 0.0
    %149 = vmatprep.subr.mxu0 0.0
    %150 = vmatpush2.msra.mxu0 0.0
    %151 = vmatprep.subr.mxu0 0.0
    %152 = vmatpush2.msra.mxu0 0.0
    %153 = vmatprep.subr.mxu0 0.0
    %154 = vmatpush2.msra.mxu0 0.0
    %155 = vmatprep.subr.mxu0 0.0
    %156 = vmatpush2.msra.mxu0 0.0
    %157 = vmatprep.subr.mxu0 0.0
    %158 = vmatpush2.msra.mxu0 0.0
    %159 = vmatprep.subr.mxu0 0.0
    %160 = vmatpush2.msra.mxu0 0.0
    %161 = vmatprep.subr.mxu0 0.0
    %162 = vmatpush2.msra.mxu0 0.0
    %163 = vmatprep.subr.mxu0 0.0
    %164 = vmatpush2.msra.mxu0 0.0
    %165 = vmatprep.subr.mxu0 0.0
    %166 = vmatpush2.msra.mxu0 0.0
    %167 = vmatprep.subr.mxu0 0.0
    %168 = vmatpush2.msra.mxu0 0.0
    %169 = vmatprep.mubr.f32.mxu0 0.0
    %170 = vmatmul.mubr.f32.gmra.mxu0 %v94
    %v171 = vpop.f32.mrf.mxu0
    %v172 = vadd.f32 %v90, %v171
    %v173 = vpop.f32.mrf.mxu0
    %174 = vmatprep.mubr.f32.mxu0 0.0
    %175 = vmatmul.mubr.f32.gmra.mxu0 %v97
    %v176 = vpop.f32.mrf.mxu0
    %v177 = vadd.f32 %v90, %v176
    %v178 = vpop.f32.mrf.mxu0
    %179 = vmatprep.mubr.f32.mxu0 0.0
    %180 = vmatmul.mubr.f32.gmra.mxu0 %v100
    %v181 = vpop.f32.mrf.mxu0
    %v182 = vadd.f32 %v90, %v181
    %v183 = vpop.f32.mrf.mxu0
    %184 = vmatprep.mubr.f32.mxu0 0.0
    %185 = vmatmul.mubr.f32.gmra.mxu0 %v103
    %v186 = vpop.f32.mrf.mxu0
    %v187 = vadd.f32 %v90, %v186
    %v188 = vpop.f32.mrf.mxu0
    %189 = vdwg.mxu0
    %v190 = vld [vmem:[#allocation8] sm:$0xff]
    %v191 = vld [vmem:[#allocation8 + $0x8] sm:$0xff]
    %v192 = vld [vmem:[#allocation8 + $0x10] sm:$0xff]
    %v193 = vld [vmem:[#allocation8 + $0x18] sm:$0xff]
    %v194 = vld [vmem:[#allocation5] sm:$0x3]
    %v195 = vld [vmem:[%s2] sm:$0x3]
    %v196 = vlaneseq
    %v197 = vand.u32 %v196, 127
    %v199 = vsel %vm92, %v194, 0
    %201 = vmatprep.subr.mxu0 0.0
    %202 = vmatpush1.msra.mxu0 0.0
    %203 = vmatprep.subr.mxu0 0.0
    %204 = vmatpush1.msra.mxu0 0.0
    %205 = vmatprep.subr.mxu0 0.0
    %206 = vmatpush1.msra.mxu0 0.0
    %207 = vmatprep.subr.mxu0 0.0
    %208 = vmatpush1.msra.mxu0 0.0
    %209 = vmatprep.subr.mxu0 0.0
    %210 = vmatpush1.msra.mxu0 0.0
    %211 = vmatprep.subr.mxu0 0.0
    %212 = vmatpush1.msra.mxu0 0.0
    %213 = vmatprep.subr.mxu0 0.0
    %214 = vmatpush1.msra.mxu0 0.0
    %215 = vmatprep.subr.mxu0 0.0
    %216 = vmatpush1.msra.mxu0 0.0
    %217 = vmatprep.subr.mxu0 0.0
    %218 = vmatpush1.msra.mxu0 0.0
    %219 = vmatprep.subr.mxu0 0.0
    %220 = vmatpush1.msra.mxu0 0.0
    %221 = vmatprep.subr.mxu0 0.0
    %222 = vmatpush1.msra.mxu0 0.0
    %223 = vmatprep.subr.mxu0 0.0
    %224 = vmatpush1.msra.mxu0 0.0
    %225 = vmatprep.subr.mxu0 0.0
    %226 = vmatpush1.msra.mxu0 %v193
    %227 = vmatprep.subr.mxu0 0.0
    %228 = vmatpush1.msra.mxu0 %v192
    %229 = vmatprep.subr.mxu0 0.0
    %230 = vmatpush1.msra.mxu0 %v191
    %231 = vmatprep.subr.mxu0 0.0
    %232 = vmatpush1.msra.mxu0 %v190
    %233 = vmatprep.subr.mxu0 0.0
    %234 = vmatpush2.msra.mxu0 0.0
    %235 = vmatprep.subr.mxu0 0.0
    %236 = vmatpush2.msra.mxu0 0.0
    %237 = vmatprep.subr.mxu0 0.0
    %238 = vmatpush2.msra.mxu0 0.0
    %239 = vmatprep.subr.mxu0 0.0
    %240 = vmatpush2.msra.mxu0 0.0
    %241 = vmatprep.subr.mxu0 0.0
    %242 = vmatpush2.msra.mxu0 0.0
    %243 = vmatprep.subr.mxu0 0.0
    %244 = vmatpush2.msra.mxu0 0.0
    %245 = vmatprep.subr.mxu0 0.0
    %246 = vmatpush2.msra.mxu0 0.0
    %247 = vmatprep.subr.mxu0 0.0
    %248 = vmatpush2.msra.mxu0 0.0
    %249 = vmatprep.subr.mxu0 0.0
    %250 = vmatpush2.msra.mxu0 0.0
    %251 = vmatprep.subr.mxu0 0.0
    %252 = vmatpush2.msra.mxu0 0.0
    %253 = vmatprep.subr.mxu0 0.0
    %254 = vmatpush2.msra.mxu0 0.0
    %255 = vmatprep.subr.mxu0 0.0
    %256 = vmatpush2.msra.mxu0 0.0
    %257 = vmatprep.subr.mxu0 0.0
    %258 = vmatpush2.msra.mxu0 0.0
    %259 = vmatprep.subr.mxu0 0.0
    %260 = vmatpush2.msra.mxu0 0.0
    %261 = vmatprep.subr.mxu0 0.0
    %262 = vmatpush2.msra.mxu0 0.0
    %263 = vmatprep.subr.mxu0 0.0
    %264 = vmatpush2.msra.mxu0 0.0
    %265 = vmatprep.mubr.f32.mxu0 0.0
    %266 = vmatmul.mubr.f32.gmra.mxu0 %v199
    %v267 = vpop.f32.mrf.mxu0
    %v268 = vadd.f32 0.0, %v267
    %v269 = vpop.f32.mrf.mxu0
    %270 = vdwg.mxu0
    %v271 = vadd.f32 %v172, %v268
    %v272 = vxor.u32 %v271, 2147483648
    %v273 = vmul.f32 %v272, 1.442695
    %v274 = vpow.pop %v273
    %v275 = vadd.f32 %v274, 1.0
    %v276 = vrcp.pop %v275
    %v277 = vmul.f32 1.0, %v276
    %v278 = vtanh.pop %v271
    %280 = vrot.lane.b32.xlu0 %v195, 32
    %v281 = vpop.permute.xlu0 %280
    %v283 = vmul.f32 %v277, %v281
    %285 = vrot.lane.b32.xlu0 %v278, 32
    %v286 = vpop.permute.xlu0 %285
    %v288 = vmul.f32 %v277, %v286
    %290 = vrot.lane.b32.xlu0 %v288, 32
    %v291 = vpop.permute.xlu0 %290
    %v293 = vadd.f32 %v283, %v291
    %v294 = vtanh.pop %v293
    %296 = vrot.lane.b32.xlu0 %v294, 32
    %v297 = vpop.permute.xlu0 %296
    %v299 = vmul.f32 %v277, %v297
    %301 = vrot.lane.b32.xlu0 %v299, 64
    %v302 = vpop.permute.xlu0 %301
    %v303 = vsel %vm92, %v302, 0
    %305 = vmatprep.subr.mxu0 0.0
    %306 = vmatpush1.msra.mxu0 0.0
    %307 = vmatprep.subr.mxu0 0.0
    %308 = vmatpush1.msra.mxu0 0.0
    %309 = vmatprep.subr.mxu0 0.0
    %310 = vmatpush1.msra.mxu0 0.0
    %311 = vmatprep.subr.mxu0 0.0
    %312 = vmatpush1.msra.mxu0 0.0
    %313 = vmatprep.subr.mxu0 0.0
    %314 = vmatpush1.msra.mxu0 0.0
    %315 = vmatprep.subr.mxu0 0.0
    %316 = vmatpush1.msra.mxu0 0.0
    %317 = vmatprep.subr.mxu0 0.0
    %318 = vmatpush1.msra.mxu0 0.0
    %319 = vmatprep.subr.mxu0 0.0
    %320 = vmatpush1.msra.mxu0 0.0
    %321 = vmatprep.subr.mxu0 0.0
    %322 = vmatpush1.msra.mxu0 0.0
    %323 = vmatprep.subr.mxu0 0.0
    %324 = vmatpush1.msra.mxu0 0.0
    %325 = vmatprep.subr.mxu0 0.0
    %326 = vmatpush1.msra.mxu0 0.0
    %327 = vmatprep.subr.mxu0 0.0
    %328 = vmatpush1.msra.mxu0 0.0
    %329 = vmatprep.subr.mxu0 0.0
    %330 = vmatpush1.msra.mxu0 %v193
    %331 = vmatprep.subr.mxu0 0.0
    %332 = vmatpush1.msra.mxu0 %v192
    %333 = vmatprep.subr.mxu0 0.0
    %334 = vmatpush1.msra.mxu0 %v191
    %335 = vmatprep.subr.mxu0 0.0
    %336 = vmatpush1.msra.mxu0 %v190
    %337 = vmatprep.subr.mxu0 0.0
    %338 = vmatpush2.msra.mxu0 0.0
    %339 = vmatprep.subr.mxu0 0.0
    %340 = vmatpush2.msra.mxu0 0.0
    %341 = vmatprep.subr.mxu0 0.0
    %342 = vmatpush2.msra.mxu0 0.0
    %343 = vmatprep.subr.mxu0 0.0
    %344 = vmatpush2.msra.mxu0 0.0
    %345 = vmatprep.subr.mxu0 0.0
    %346 = vmatpush2.msra.mxu0 0.0
    %347 = vmatprep.subr.mxu0 0.0
    %348 = vmatpush2.msra.mxu0 0.0
    %349 = vmatprep.subr.mxu0 0.0
    %350 = vmatpush2.msra.mxu0 0.0
    %351 = vmatprep.subr.mxu0 0.0
    %352 = vmatpush2.msra.mxu0 0.0
    %353 = vmatprep.subr.mxu0 0.0
    %354 = vmatpush2.msra.mxu0 0.0
    %355 = vmatprep.subr.mxu0 0.0
    %356 = vmatpush2.msra.mxu0 0.0
    %357 = vmatprep.subr.mxu0 0.0
    %358 = vmatpush2.msra.mxu0 0.0
    %359 = vmatprep.subr.mxu0 0.0
    %360 = vmatpush2.msra.mxu0 0.0
    %361 = vmatprep.subr.mxu0 0.0
    %362 = vmatpush2.msra.mxu0 0.0
    %363 = vmatprep.subr.mxu0 0.0
    %364 = vmatpush2.msra.mxu0 0.0
    %365 = vmatprep.subr.mxu0 0.0
    %366 = vmatpush2.msra.mxu0 0.0
    %367 = vmatprep.subr.mxu0 0.0
    %368 = vmatpush2.msra.mxu0 0.0
    %369 = vmatprep.mubr.f32.mxu0 0.0
    %370 = vmatmul.mubr.f32.gmra.mxu0 %v303
    %v371 = vpop.f32.mrf.mxu0
    %v372 = vadd.f32 0.0, %v371
    %v373 = vpop.f32.mrf.mxu0
    %374 = vdwg.mxu0
    %v376 = vrot.slane %v372, 6
    %v378 = vadd.f32 %v172, %v376
    %v379 = vxor.u32 %v378, 2147483648
    %v380 = vmul.f32 %v379, 1.442695
    %v381 = vpow.pop %v380
    %v382 = vadd.f32 %v381, 1.0
    %v383 = vrcp.pop %v382
    %v384 = vmul.f32 1.0, %v383
    %v385 = vtanh.pop %v378
    %v387 = vrot.slane %v293, 6
    %v389 = vmul.f32 %v384, %v387
    %391 = vrot.lane.b32.xlu0 %v385, 32
    %v392 = vpop.permute.xlu0 %391
    %v394 = vmul.f32 %v384, %v392
    %396 = vrot.lane.b32.xlu0 %v394, 32
    %v397 = vpop.permute.xlu0 %396
    %v399 = vadd.f32 %v389, %v397
    %v400 = vtanh.pop %v399
    %402 = vrot.lane.b32.xlu0 %v400, 32
    %v403 = vpop.permute.xlu0 %402
    %v405 = vmul.f32 %v384, %v403
    %v407 = vrot.slane %v405, 2
    %408 = vrot.lane.b32.xlu0 %v407, 64
    %v409 = vpop.permute.xlu0 %408
    %v410 = vsel %vm92, %v409, 0
    %412 = vmatprep.subr.mxu0 0.0
    %413 = vmatpush1.msra.mxu0 0.0
    %414 = vmatprep.subr.mxu0 0.0
    %415 = vmatpush1.msra.mxu0 0.0
    %416 = vmatprep.subr.mxu0 0.0
    %417 = vmatpush1.msra.mxu0 0.0
    %418 = vmatprep.subr.mxu0 0.0
    %419 = vmatpush1.msra.mxu0 0.0
    %420 = vmatprep.subr.mxu0 0.0
    %421 = vmatpush1.msra.mxu0 0.0
    %422 = vmatprep.subr.mxu0 0.0
    %423 = vmatpush1.msra.mxu0 0.0
    %424 = vmatprep.subr.mxu0 0.0
    %425 = vmatpush1.msra.mxu0 0.0
    %426 = vmatprep.subr.mxu0 0.0
    %427 = vmatpush1.msra.mxu0 0.0
    %428 = vmatprep.subr.mxu0 0.0
    %429 = vmatpush1.msra.mxu0 0.0
    %430 = vmatprep.subr.mxu0 0.0
    %431 = vmatpush1.msra.mxu0 0.0
    %432 = vmatprep.subr.mxu0 0.0
    %433 = vmatpush1.msra.mxu0 0.0
    %434 = vmatprep.subr.mxu0 0.0
    %435 = vmatpush1.msra.mxu0 0.0
    %436 = vmatprep.subr.mxu0 0.0
    %437 = vmatpush1.msra.mxu0 %v193
    %438 = vmatprep.subr.mxu0 0.0
    %439 = vmatpush1.msra.mxu0 %v192
    %440 = vmatprep.subr.mxu0 0.0
    %441 = vmatpush1.msra.mxu0 %v191
    %442 = vmatprep.subr.mxu0 0.0
    %443 = vmatpush1.msra.mxu0 %v190
    %444 = vmatprep.subr.mxu0 0.0
    %445 = vmatpush2.msra.mxu0 0.0
    %446 = vmatprep.subr.mxu0 0.0
    %447 = vmatpush2.msra.mxu0 0.0
    %448 = vmatprep.subr.mxu0 0.0
    %449 = vmatpush2.msra.mxu0 0.0
    %450 = vmatprep.subr.mxu0 0.0
    %451 = vmatpush2.msra.mxu0 0.0
    %452 = vmatprep.subr.mxu0 0.0
    %453 = vmatpush2.msra.mxu0 0.0
    %454 = vmatprep.subr.mxu0 0.0
    %455 = vmatpush2.msra.mxu0 0.0
    %456 = vmatprep.subr.mxu0 0.0
    %457 = vmatpush2.msra.mxu0 0.0
    %458 = vmatprep.subr.mxu0 0.0
    %459 = vmatpush2.msra.mxu0 0.0
    %460 = vmatprep.subr.mxu0 0.0
    %461 = vmatpush2.msra.mxu0 0.0
    %462 = vmatprep.subr.mxu0 0.0
    %463 = vmatpush2.msra.mxu0 0.0
    %464 = vmatprep.subr.mxu0 0.0
    %465 = vmatpush2.msra.mxu0 0.0
    %466 = vmatprep.subr.mxu0 0.0
    %467 = vmatpush2.msra.mxu0 0.0
    %468 = vmatprep.subr.mxu0 0.0
    %469 = vmatpush2.msra.mxu0 0.0
    %470 = vmatprep.subr.mxu0 0.0
    %471 = vmatpush2.msra.mxu0 0.0
    %472 = vmatprep.subr.mxu0 0.0
    %473 = vmatpush2.msra.mxu0 0.0
    %474 = vmatprep.subr.mxu0 0.0
    %475 = vmatpush2.msra.mxu0 0.0
    %476 = vmatprep.mubr.f32.mxu0 0.0
    %477 = vmatmul.mubr.f32.gmra.mxu0 %v410
    %v478 = vpop.f32.mrf.mxu0
    %v479 = vadd.f32 0.0, %v478
    %v480 = vpop.f32.mrf.mxu0
    %481 = vdwg.mxu0
    %v483 = vrot.slane %v479, 4
    %v485 = vadd.f32 %v172, %v483
    %v486 = vxor.u32 %v485, 2147483648
    %v487 = vmul.f32 %v486, 1.442695
    %v488 = vpow.pop %v487
    %v489 = vadd.f32 %v488, 1.0
    %v490 = vrcp.pop %v489
    %v491 = vmul.f32 1.0, %v490
    %v492 = vtanh.pop %v485
    %v494 = vrot.slane %v399, 6
    %v496 = vmul.f32 %v491, %v494
    %498 = vrot.lane.b32.xlu0 %v492, 32
    %v499 = vpop.permute.xlu0 %498
    %v501 = vmul.f32 %v491, %v499
    %503 = vrot.lane.b32.xlu0 %v501, 32
    %v504 = vpop.permute.xlu0 %503
    %v506 = vadd.f32 %v496, %v504
    %v507 = vtanh.pop %v506
    %509 = vrot.lane.b32.xlu0 %v507, 32
    %v510 = vpop.permute.xlu0 %509
    %v512 = vmul.f32 %v491, %v510
    %v514 = vrot.slane %v512, 4
    %515 = vrot.lane.b32.xlu0 %v514, 64
    %v516 = vpop.permute.xlu0 %515
    %v517 = vsel %vm92, %v516, 0
    %519 = vmatprep.subr.mxu0 0.0
    %520 = vmatpush1.msra.mxu0 0.0
    %521 = vmatprep.subr.mxu0 0.0
    %522 = vmatpush1.msra.mxu0 0.0
    %523 = vmatprep.subr.mxu0 0.0
    %524 = vmatpush1.msra.mxu0 0.0
    %525 = vmatprep.subr.mxu0 0.0
    %526 = vmatpush1.msra.mxu0 0.0
    %527 = vmatprep.subr.mxu0 0.0
    %528 = vmatpush1.msra.mxu0 0.0
    %529 = vmatprep.subr.mxu0 0.0
    %530 = vmatpush1.msra.mxu0 0.0
    %531 = vmatprep.subr.mxu0 0.0
    %532 = vmatpush1.msra.mxu0 0.0
    %533 = vmatprep.subr.mxu0 0.0
    %534 = vmatpush1.msra.mxu0 0.0
    %535 = vmatprep.subr.mxu0 0.0
    %536 = vmatpush1.msra.mxu0 0.0
    %537 = vmatprep.subr.mxu0 0.0
    %538 = vmatpush1.msra.mxu0 0.0
    %539 = vmatprep.subr.mxu0 0.0
    %540 = vmatpush1.msra.mxu0 0.0
    %541 = vmatprep.subr.mxu0 0.0
    %542 = vmatpush1.msra.mxu0 0.0
    %543 = vmatprep.subr.mxu0 0.0
    %544 = vmatpush1.msra.mxu0 %v193
    %545 = vmatprep.subr.mxu0 0.0
    %546 = vmatpush1.msra.mxu0 %v192
    %547 = vmatprep.subr.mxu0 0.0
    %548 = vmatpush1.msra.mxu0 %v191
    %549 = vmatprep.subr.mxu0 0.0
    %550 = vmatpush1.msra.mxu0 %v190
    %551 = vmatprep.subr.mxu0 0.0
    %552 = vmatpush2.msra.mxu0 0.0
    %553 = vmatprep.subr.mxu0 0.0
    %554 = vmatpush2.msra.mxu0 0.0
    %555 = vmatprep.subr.mxu0 0.0
    %556 = vmatpush2.msra.mxu0 0.0
    %557 = vmatprep.subr.mxu0 0.0
    %558 = vmatpush2.msra.mxu0 0.0
    %559 = vmatprep.subr.mxu0 0.0
    %560 = vmatpush2.msra.mxu0 0.0
    %561 = vmatprep.subr.mxu0 0.0
    %562 = vmatpush2.msra.mxu0 0.0
    %563 = vmatprep.subr.mxu0 0.0
    %564 = vmatpush2.msra.mxu0 0.0
    %565 = vmatprep.subr.mxu0 0.0
    %566 = vmatpush2.msra.mxu0 0.0
    %567 = vmatprep.subr.mxu0 0.0
    %568 = vmatpush2.msra.mxu0 0.0
    %569 = vmatprep.subr.mxu0 0.0
    %570 = vmatpush2.msra.mxu0 0.0
    %571 = vmatprep.subr.mxu0 0.0
    %572 = vmatpush2.msra.mxu0 0.0
    %573 = vmatprep.subr.mxu0 0.0
    %574 = vmatpush2.msra.mxu0 0.0
    %575 = vmatprep.subr.mxu0 0.0
    %576 = vmatpush2.msra.mxu0 0.0
    %577 = vmatprep.subr.mxu0 0.0
    %578 = vmatpush2.msra.mxu0 0.0
    %579 = vmatprep.subr.mxu0 0.0
    %580 = vmatpush2.msra.mxu0 0.0
    %581 = vmatprep.subr.mxu0 0.0
    %582 = vmatpush2.msra.mxu0 0.0
    %583 = vmatprep.mubr.f32.mxu0 0.0
    %584 = vmatmul.mubr.f32.gmra.mxu0 %v517
    %v585 = vpop.f32.mrf.mxu0
    %v586 = vadd.f32 0.0, %v585
    %v587 = vpop.f32.mrf.mxu0
    %588 = vdwg.mxu0
    %v590 = vrot.slane %v586, 2
    %v592 = vadd.f32 %v172, %v590
    %v593 = vxor.u32 %v592, 2147483648
    %v594 = vmul.f32 %v593, 1.442695
    %v595 = vpow.pop %v594
    %v596 = vadd.f32 %v595, 1.0
    %v597 = vrcp.pop %v596
    %v598 = vmul.f32 1.0, %v597
    %v599 = vtanh.pop %v592
    %v601 = vrot.slane %v506, 6
    %v603 = vmul.f32 %v598, %v601
    %605 = vrot.lane.b32.xlu0 %v599, 32
    %v606 = vpop.permute.xlu0 %605
    %v608 = vmul.f32 %v598, %v606
    %610 = vrot.lane.b32.xlu0 %v608, 32
    %v611 = vpop.permute.xlu0 %610
    %v613 = vadd.f32 %v603, %v611
    %v614 = vtanh.pop %v613
    %616 = vrot.lane.b32.xlu0 %v614, 32
    %v617 = vpop.permute.xlu0 %616
    %v619 = vmul.f32 %v598, %v617
    %v621 = vrot.slane %v619, 6
    %622 = vrot.lane.b32.xlu0 %v621, 64
    %v623 = vpop.permute.xlu0 %622
    %v624 = vsel %vm92, %v623, 0
    %626 = vmatprep.subr.mxu0 0.0
    %627 = vmatpush1.msra.mxu0 0.0
    %628 = vmatprep.subr.mxu0 0.0
    %629 = vmatpush1.msra.mxu0 0.0
    %630 = vmatprep.subr.mxu0 0.0
    %631 = vmatpush1.msra.mxu0 0.0
    %632 = vmatprep.subr.mxu0 0.0
    %633 = vmatpush1.msra.mxu0 0.0
    %634 = vmatprep.subr.mxu0 0.0
    %635 = vmatpush1.msra.mxu0 0.0
    %636 = vmatprep.subr.mxu0 0.0
    %637 = vmatpush1.msra.mxu0 0.0
    %638 = vmatprep.subr.mxu0 0.0
    %639 = vmatpush1.msra.mxu0 0.0
    %640 = vmatprep.subr.mxu0 0.0
    %641 = vmatpush1.msra.mxu0 0.0
    %642 = vmatprep.subr.mxu0 0.0
    %643 = vmatpush1.msra.mxu0 0.0
    %644 = vmatprep.subr.mxu0 0.0
    %645 = vmatpush1.msra.mxu0 0.0
    %646 = vmatprep.subr.mxu0 0.0
    %647 = vmatpush1.msra.mxu0 0.0
    %648 = vmatprep.subr.mxu0 0.0
    %649 = vmatpush1.msra.mxu0 0.0
    %650 = vmatprep.subr.mxu0 0.0
    %651 = vmatpush1.msra.mxu0 %v193
    %652 = vmatprep.subr.mxu0 0.0
    %653 = vmatpush1.msra.mxu0 %v192
    %654 = vmatprep.subr.mxu0 0.0
    %655 = vmatpush1.msra.mxu0 %v191
    %656 = vmatprep.subr.mxu0 0.0
    %657 = vmatpush1.msra.mxu0 %v190
    %658 = vmatprep.subr.mxu0 0.0
    %659 = vmatpush2.msra.mxu0 0.0
    %660 = vmatprep.subr.mxu0 0.0
    %661 = vmatpush2.msra.mxu0 0.0
    %662 = vmatprep.subr.mxu0 0.0
    %663 = vmatpush2.msra.mxu0 0.0
    %664 = vmatprep.subr.mxu0 0.0
    %665 = vmatpush2.msra.mxu0 0.0
    %666 = vmatprep.subr.mxu0 0.0
    %667 = vmatpush2.msra.mxu0 0.0
    %668 = vmatprep.subr.mxu0 0.0
    %669 = vmatpush2.msra.mxu0 0.0
    %670 = vmatprep.subr.mxu0 0.0
    %671 = vmatpush2.msra.mxu0 0.0
    %672 = vmatprep.subr.mxu0 0.0
    %673 = vmatpush2.msra.mxu0 0.0
    %674 = vmatprep.subr.mxu0 0.0
    %675 = vmatpush2.msra.mxu0 0.0
    %676 = vmatprep.subr.mxu0 0.0
    %677 = vmatpush2.msra.mxu0 0.0
    %678 = vmatprep.subr.mxu0 0.0
    %679 = vmatpush2.msra.mxu0 0.0
    %680 = vmatprep.subr.mxu0 0.0
    %681 = vmatpush2.msra.mxu0 0.0
    %682 = vmatprep.subr.mxu0 0.0
    %683 = vmatpush2.msra.mxu0 0.0
    %684 = vmatprep.subr.mxu0 0.0
    %685 = vmatpush2.msra.mxu0 0.0
    %686 = vmatprep.subr.mxu0 0.0
    %687 = vmatpush2.msra.mxu0 0.0
    %688 = vmatprep.subr.mxu0 0.0
    %689 = vmatpush2.msra.mxu0 0.0
    %690 = vmatprep.mubr.f32.mxu0 0.0
    %691 = vmatmul.mubr.f32.gmra.mxu0 %v624
    %v692 = vpop.f32.mrf.mxu0
    %v693 = vadd.f32 0.0, %v692
    %v694 = vpop.f32.mrf.mxu0
    %695 = vdwg.mxu0
    %v696 = vadd.f32 %v177, %v693
    %v697 = vxor.u32 %v696, 2147483648
    %v698 = vmul.f32 %v697, 1.442695
    %v699 = vpow.pop %v698
    %v700 = vadd.f32 %v699, 1.0
    %v701 = vrcp.pop %v700
    %v702 = vmul.f32 1.0, %v701
    %v703 = vtanh.pop %v696
    %v705 = vrot.slane %v613, 6
    %v707 = vmul.f32 %v702, %v705
    %709 = vrot.lane.b32.xlu0 %v703, 32
    %v710 = vpop.permute.xlu0 %709
    %v712 = vmul.f32 %v702, %v710
    %714 = vrot.lane.b32.xlu0 %v712, 32
    %v715 = vpop.permute.xlu0 %714
    %v717 = vadd.f32 %v707, %v715
    %v718 = vtanh.pop %v717
    %720 = vrot.lane.b32.xlu0 %v718, 32
    %v721 = vpop.permute.xlu0 %720
    %v723 = vmul.f32 %v702, %v721
    %725 = vrot.lane.b32.xlu0 %v723, 64
    %v726 = vpop.permute.xlu0 %725
    %v727 = vsel %vm92, %v726, 0
    %729 = vmatprep.subr.mxu0 0.0
    %730 = vmatpush1.msra.mxu0 0.0
    %731 = vmatprep.subr.mxu0 0.0
    %732 = vmatpush1.msra.mxu0 0.0
    %733 = vmatprep.subr.mxu0 0.0
    %734 = vmatpush1.msra.mxu0 0.0
    %735 = vmatprep.subr.mxu0 0.0
    %736 = vmatpush1.msra.mxu0 0.0
    %737 = vmatprep.subr.mxu0 0.0
    %738 = vmatpush1.msra.mxu0 0.0
    %739 = vmatprep.subr.mxu0 0.0
    %740 = vmatpush1.msra.mxu0 0.0
    %741 = vmatprep.subr.mxu0 0.0
    %742 = vmatpush1.msra.mxu0 0.0
    %743 = vmatprep.subr.mxu0 0.0
    %744 = vmatpush1.msra.mxu0 0.0
    %745 = vmatprep.subr.mxu0 0.0
    %746 = vmatpush1.msra.mxu0 0.0
    %747 = vmatprep.subr.mxu0 0.0
    %748 = vmatpush1.msra.mxu0 0.0
    %749 = vmatprep.subr.mxu0 0.0
    %750 = vmatpush1.msra.mxu0 0.0
    %751 = vmatprep.subr.mxu0 0.0
    %752 = vmatpush1.msra.mxu0 0.0
    %753 = vmatprep.subr.mxu0 0.0
    %754 = vmatpush1.msra.mxu0 %v193
    %755 = vmatprep.subr.mxu0 0.0
    %756 = vmatpush1.msra.mxu0 %v192
    %757 = vmatprep.subr.mxu0 0.0
    %758 = vmatpush1.msra.mxu0 %v191
    %759 = vmatprep.subr.mxu0 0.0
    %760 = vmatpush1.msra.mxu0 %v190
    %761 = vmatprep.subr.mxu0 0.0
    %762 = vmatpush2.msra.mxu0 0.0
    %763 = vmatprep.subr.mxu0 0.0
    %764 = vmatpush2.msra.mxu0 0.0
    %765 = vmatprep.subr.mxu0 0.0
    %766 = vmatpush2.msra.mxu0 0.0
    %767 = vmatprep.subr.mxu0 0.0
    %768 = vmatpush2.msra.mxu0 0.0
    %769 = vmatprep.subr.mxu0 0.0
    %770 = vmatpush2.msra.mxu0 0.0
    %771 = vmatprep.subr.mxu0 0.0
    %772 = vmatpush2.msra.mxu0 0.0
    %773 = vmatprep.subr.mxu0 0.0
    %774 = vmatpush2.msra.mxu0 0.0
    %775 = vmatprep.subr.mxu0 0.0
    %776 = vmatpush2.msra.mxu0 0.0
    %777 = vmatprep.subr.mxu0 0.0
    %778 = vmatpush2.msra.mxu0 0.0
    %779 = vmatprep.subr.mxu0 0.0
    %780 = vmatpush2.msra.mxu0 0.0
    %781 = vmatprep.subr.mxu0 0.0
    %782 = vmatpush2.msra.mxu0 0.0
    %783 = vmatprep.subr.mxu0 0.0
    %784 = vmatpush2.msra.mxu0 0.0
    %785 = vmatprep.subr.mxu0 0.0
    %786 = vmatpush2.msra.mxu0 0.0
    %787 = vmatprep.subr.mxu0 0.0
    %788 = vmatpush2.msra.mxu0 0.0
    %789 = vmatprep.subr.mxu0 0.0
    %790 = vmatpush2.msra.mxu0 0.0
    %791 = vmatprep.subr.mxu0 0.0
    %792 = vmatpush2.msra.mxu0 0.0
    %793 = vmatprep.mubr.f32.mxu0 0.0
    %794 = vmatmul.mubr.f32.gmra.mxu0 %v727
    %v795 = vpop.f32.mrf.mxu0
    %v796 = vadd.f32 0.0, %v795
    %v797 = vpop.f32.mrf.mxu0
    %798 = vdwg.mxu0
    %v800 = vrot.slane %v796, 6
    %v802 = vadd.f32 %v177, %v800
    %v803 = vxor.u32 %v802, 2147483648
    %v804 = vmul.f32 %v803, 1.442695
    %v805 = vpow.pop %v804
    %v806 = vadd.f32 %v805, 1.0
    %v807 = vrcp.pop %v806
    %v808 = vmul.f32 1.0, %v807
    %v809 = vtanh.pop %v802
    %v811 = vrot.slane %v717, 6
    %v813 = vmul.f32 %v808, %v811
    %815 = vrot.lane.b32.xlu0 %v809, 32
    %v816 = vpop.permute.xlu0 %815
    %v818 = vmul.f32 %v808, %v816
    %820 = vrot.lane.b32.xlu0 %v818, 32
    %v821 = vpop.permute.xlu0 %820
    %v823 = vadd.f32 %v813, %v821
    %v824 = vtanh.pop %v823
    %826 = vrot.lane.b32.xlu0 %v824, 32
    %v827 = vpop.permute.xlu0 %826
    %v829 = vmul.f32 %v808, %v827
    %v831 = vrot.slane %v829, 2
    %832 = vrot.lane.b32.xlu0 %v831, 64
    %v833 = vpop.permute.xlu0 %832
    %v834 = vsel %vm92, %v833, 0
    %836 = vmatprep.subr.mxu0 0.0
    %837 = vmatpush1.msra.mxu0 0.0
    %838 = vmatprep.subr.mxu0 0.0
    %839 = vmatpush1.msra.mxu0 0.0
    %840 = vmatprep.subr.mxu0 0.0
    %841 = vmatpush1.msra.mxu0 0.0
    %842 = vmatprep.subr.mxu0 0.0
    %843 = vmatpush1.msra.mxu0 0.0
    %844 = vmatprep.subr.mxu0 0.0
    %845 = vmatpush1.msra.mxu0 0.0
    %846 = vmatprep.subr.mxu0 0.0
    %847 = vmatpush1.msra.mxu0 0.0
    %848 = vmatprep.subr.mxu0 0.0
    %849 = vmatpush1.msra.mxu0 0.0
    %850 = vmatprep.subr.mxu0 0.0
    %851 = vmatpush1.msra.mxu0 0.0
    %852 = vmatprep.subr.mxu0 0.0
    %853 = vmatpush1.msra.mxu0 0.0
    %854 = vmatprep.subr.mxu0 0.0
    %855 = vmatpush1.msra.mxu0 0.0
    %856 = vmatprep.subr.mxu0 0.0
    %857 = vmatpush1.msra.mxu0 0.0
    %858 = vmatprep.subr.mxu0 0.0
    %859 = vmatpush1.msra.mxu0 0.0
    %860 = vmatprep.subr.mxu0 0.0
    %861 = vmatpush1.msra.mxu0 %v193
    %862 = vmatprep.subr.mxu0 0.0
    %863 = vmatpush1.msra.mxu0 %v192
    %864 = vmatprep.subr.mxu0 0.0
    %865 = vmatpush1.msra.mxu0 %v191
    %866 = vmatprep.subr.mxu0 0.0
    %867 = vmatpush1.msra.mxu0 %v190
    %868 = vmatprep.subr.mxu0 0.0
    %869 = vmatpush2.msra.mxu0 0.0
    %870 = vmatprep.subr.mxu0 0.0
    %871 = vmatpush2.msra.mxu0 0.0
    %872 = vmatprep.subr.mxu0 0.0
    %873 = vmatpush2.msra.mxu0 0.0
    %874 = vmatprep.subr.mxu0 0.0
    %875 = vmatpush2.msra.mxu0 0.0
    %876 = vmatprep.subr.mxu0 0.0
    %877 = vmatpush2.msra.mxu0 0.0
    %878 = vmatprep.subr.mxu0 0.0
    %879 = vmatpush2.msra.mxu0 0.0
    %880 = vmatprep.subr.mxu0 0.0
    %881 = vmatpush2.msra.mxu0 0.0
    %882 = vmatprep.subr.mxu0 0.0
    %883 = vmatpush2.msra.mxu0 0.0
    %884 = vmatprep.subr.mxu0 0.0
    %885 = vmatpush2.msra.mxu0 0.0
    %886 = vmatprep.subr.mxu0 0.0
    %887 = vmatpush2.msra.mxu0 0.0
    %888 = vmatprep.subr.mxu0 0.0
    %889 = vmatpush2.msra.mxu0 0.0
    %890 = vmatprep.subr.mxu0 0.0
    %891 = vmatpush2.msra.mxu0 0.0
    %892 = vmatprep.subr.mxu0 0.0
    %893 = vmatpush2.msra.mxu0 0.0
    %894 = vmatprep.subr.mxu0 0.0
    %895 = vmatpush2.msra.mxu0 0.0
    %896 = vmatprep.subr.mxu0 0.0
    %897 = vmatpush2.msra.mxu0 0.0
    %898 = vmatprep.subr.mxu0 0.0
    %899 = vmatpush2.msra.mxu0 0.0
    %900 = vmatprep.mubr.f32.mxu0 0.0
    %901 = vmatmul.mubr.f32.gmra.mxu0 %v834
    %v902 = vpop.f32.mrf.mxu0
    %v903 = vadd.f32 0.0, %v902
    %v904 = vpop.f32.mrf.mxu0
    %905 = vdwg.mxu0
    %v907 = vrot.slane %v903, 4
    %v909 = vadd.f32 %v177, %v907
    %v910 = vxor.u32 %v909, 2147483648
    %v911 = vmul.f32 %v910, 1.442695
    %v912 = vpow.pop %v911
    %v913 = vadd.f32 %v912, 1.0
    %v914 = vrcp.pop %v913
    %v915 = vmul.f32 1.0, %v914
    %v916 = vtanh.pop %v909
    %v918 = vrot.slane %v823, 6
    %v920 = vmul.f32 %v915, %v918
    %922 = vrot.lane.b32.xlu0 %v916, 32
    %v923 = vpop.permute.xlu0 %922
    %v925 = vmul.f32 %v915, %v923
    %927 = vrot.lane.b32.xlu0 %v925, 32
    %v928 = vpop.permute.xlu0 %927
    %v930 = vadd.f32 %v920, %v928
    %v931 = vtanh.pop %v930
    %933 = vrot.lane.b32.xlu0 %v931, 32
    %v934 = vpop.permute.xlu0 %933
    %v936 = vmul.f32 %v915, %v934
    %v938 = vrot.slane %v936, 4
    %939 = vrot.lane.b32.xlu0 %v938, 64
    %v940 = vpop.permute.xlu0 %939
    %v941 = vsel %vm92, %v940, 0
    %943 = vmatprep.subr.mxu0 0.0
    %944 = vmatpush1.msra.mxu0 0.0
    %945 = vmatprep.subr.mxu0 0.0
    %946 = vmatpush1.msra.mxu0 0.0
    %947 = vmatprep.subr.mxu0 0.0
    %948 = vmatpush1.msra.mxu0 0.0
    %949 = vmatprep.subr.mxu0 0.0
    %950 = vmatpush1.msra.mxu0 0.0
    %951 = vmatprep.subr.mxu0 0.0
    %952 = vmatpush1.msra.mxu0 0.0
    %953 = vmatprep.subr.mxu0 0.0
    %954 = vmatpush1.msra.mxu0 0.0
    %955 = vmatprep.subr.mxu0 0.0
    %956 = vmatpush1.msra.mxu0 0.0
    %957 = vmatprep.subr.mxu0 0.0
    %958 = vmatpush1.msra.mxu0 0.0
    %959 = vmatprep.subr.mxu0 0.0
    %960 = vmatpush1.msra.mxu0 0.0
    %961 = vmatprep.subr.mxu0 0.0
    %962 = vmatpush1.msra.mxu0 0.0
    %963 = vmatprep.subr.mxu0 0.0
    %964 = vmatpush1.msra.mxu0 0.0
    %965 = vmatprep.subr.mxu0 0.0
    %966 = vmatpush1.msra.mxu0 0.0
    %967 = vmatprep.subr.mxu0 0.0
    %968 = vmatpush1.msra.mxu0 %v193
    %969 = vmatprep.subr.mxu0 0.0
    %970 = vmatpush1.msra.mxu0 %v192
    %971 = vmatprep.subr.mxu0 0.0
    %972 = vmatpush1.msra.mxu0 %v191
    %973 = vmatprep.subr.mxu0 0.0
    %974 = vmatpush1.msra.mxu0 %v190
    %975 = vmatprep.subr.mxu0 0.0
    %976 = vmatpush2.msra.mxu0 0.0
    %977 = vmatprep.subr.mxu0 0.0
    %978 = vmatpush2.msra.mxu0 0.0
    %979 = vmatprep.subr.mxu0 0.0
    %980 = vmatpush2.msra.mxu0 0.0
    %981 = vmatprep.subr.mxu0 0.0
    %982 = vmatpush2.msra.mxu0 0.0
    %983 = vmatprep.subr.mxu0 0.0
    %984 = vmatpush2.msra.mxu0 0.0
    %985 = vmatprep.subr.mxu0 0.0
    %986 = vmatpush2.msra.mxu0 0.0
    %987 = vmatprep.subr.mxu0 0.0
    %988 = vmatpush2.msra.mxu0 0.0
    %989 = vmatprep.subr.mxu0 0.0
    %990 = vmatpush2.msra.mxu0 0.0
    %991 = vmatprep.subr.mxu0 0.0
    %992 = vmatpush2.msra.mxu0 0.0
    %993 = vmatprep.subr.mxu0 0.0
    %994 = vmatpush2.msra.mxu0 0.0
    %995 = vmatprep.subr.mxu0 0.0
    %996 = vmatpush2.msra.mxu0 0.0
    %997 = vmatprep.subr.mxu0 0.0
    %998 = vmatpush2.msra.mxu0 0.0
    %999 = vmatprep.subr.mxu0 0.0
    %1000 = vmatpush2.msra.mxu0 0.0
    %1001 = vmatprep.subr.mxu0 0.0
    %1002 = vmatpush2.msra.mxu0 0.0
    %1003 = vmatprep.subr.mxu0 0.0
    %1004 = vmatpush2.msra.mxu0 0.0
    %1005 = vmatprep.subr.mxu0 0.0
    %1006 = vmatpush2.msra.mxu0 0.0
    %1007 = vmatprep.mubr.f32.mxu0 0.0
    %1008 = vmatmul.mubr.f32.gmra.mxu0 %v941
    %v1009 = vpop.f32.mrf.mxu0
    %v1010 = vadd.f32 0.0, %v1009
    %v1011 = vpop.f32.mrf.mxu0
    %1012 = vdwg.mxu0
    %v1014 = vrot.slane %v1010, 2
    %v1016 = vadd.f32 %v177, %v1014
    %v1017 = vxor.u32 %v1016, 2147483648
    %v1018 = vmul.f32 %v1017, 1.442695
    %v1019 = vpow.pop %v1018
    %v1020 = vadd.f32 %v1019, 1.0
    %v1021 = vrcp.pop %v1020
    %v1022 = vmul.f32 1.0, %v1021
    %v1023 = vtanh.pop %v1016
    %v1025 = vrot.slane %v930, 6
    %v1027 = vmul.f32 %v1022, %v1025
    %1029 = vrot.lane.b32.xlu0 %v1023, 32
    %v1030 = vpop.permute.xlu0 %1029
    %v1032 = vmul.f32 %v1022, %v1030
    %1034 = vrot.lane.b32.xlu0 %v1032, 32
    %v1035 = vpop.permute.xlu0 %1034
    %v1037 = vadd.f32 %v1027, %v1035
    %v1038 = vtanh.pop %v1037
    %1040 = vrot.lane.b32.xlu0 %v1038, 32
    %v1041 = vpop.permute.xlu0 %1040
    %v1043 = vmul.f32 %v1022, %v1041
    %v1045 = vrot.slane %v1043, 1
    %v1047 = vsub.f32 %v1043, %v1045
    %v1048 = vand.u32 2147483647, %v1047
    %1050 = vrot.lane.b32.xlu0 %v1048, 64
    %v1051 = vpop.permute.xlu0 %1050
    %vm1053 = vcmask 260102
    %v1054 = vsel %vm1053, %v1051, 0.0
    %1055 = vadd.xlane.f32.xlu0 %v1054
    %v1056 = vpop.xlane.xlu0 %1055
    %vm1057 = vcmp.eq.s32.totalorder %v197, 0
    %v1058 = vsub.f32 0.0, %v1056
    %v1059 = vmul.f32 %v1058, 1.442695
    %v1060 = vpow.pop %v1059
    %v1061 = vsel %vm1057, %v1060, 0.0
    %v1062 = vrot.slane %v1043, 6
    %1063 = vrot.lane.b32.xlu0 %v1062, 64
    %v1064 = vpop.permute.xlu0 %1063
    %v1065 = vsel %vm92, %v1064, 0
    %1067 = vmatprep.subr.mxu0 0.0
    %1068 = vmatpush1.msra.mxu0 0.0
    %1069 = vmatprep.subr.mxu0 0.0
    %1070 = vmatpush1.msra.mxu0 0.0
    %1071 = vmatprep.subr.mxu0 0.0
    %1072 = vmatpush1.msra.mxu0 0.0
    %1073 = vmatprep.subr.mxu0 0.0
    %1074 = vmatpush1.msra.mxu0 0.0
    %1075 = vmatprep.subr.mxu0 0.0
    %1076 = vmatpush1.msra.mxu0 0.0
    %1077 = vmatprep.subr.mxu0 0.0
    %1078 = vmatpush1.msra.mxu0 0.0
    %1079 = vmatprep.subr.mxu0 0.0
    %1080 = vmatpush1.msra.mxu0 0.0
    %1081 = vmatprep.subr.mxu0 0.0
    %1082 = vmatpush1.msra.mxu0 0.0
    %1083 = vmatprep.subr.mxu0 0.0
    %1084 = vmatpush1.msra.mxu0 0.0
    %1085 = vmatprep.subr.mxu0 0.0
    %1086 = vmatpush1.msra.mxu0 0.0
    %1087 = vmatprep.subr.mxu0 0.0
    %1088 = vmatpush1.msra.mxu0 0.0
    %1089 = vmatprep.subr.mxu0 0.0
    %1090 = vmatpush1.msra.mxu0 0.0
    %1091 = vmatprep.subr.mxu0 0.0
    %1092 = vmatpush1.msra.mxu0 %v193
    %1093 = vmatprep.subr.mxu0 0.0
    %1094 = vmatpush1.msra.mxu0 %v192
    %1095 = vmatprep.subr.mxu0 0.0
    %1096 = vmatpush1.msra.mxu0 %v191
    %1097 = vmatprep.subr.mxu0 0.0
    %1098 = vmatpush1.msra.mxu0 %v190
    %1099 = vmatprep.subr.mxu0 0.0
    %1100 = vmatpush2.msra.mxu0 0.0
    %1101 = vmatprep.subr.mxu0 0.0
    %1102 = vmatpush2.msra.mxu0 0.0
    %1103 = vmatprep.subr.mxu0 0.0
    %1104 = vmatpush2.msra.mxu0 0.0
    %1105 = vmatprep.subr.mxu0 0.0
    %1106 = vmatpush2.msra.mxu0 0.0
    %1107 = vmatprep.subr.mxu0 0.0
    %1108 = vmatpush2.msra.mxu0 0.0
    %1109 = vmatprep.subr.mxu0 0.0
    %1110 = vmatpush2.msra.mxu0 0.0
    %1111 = vmatprep.subr.mxu0 0.0
    %1112 = vmatpush2.msra.mxu0 0.0
    %1113 = vmatprep.subr.mxu0 0.0
    %1114 = vmatpush2.msra.mxu0 0.0
    %1115 = vmatprep.subr.mxu0 0.0
    %1116 = vmatpush2.msra.mxu0 0.0
    %1117 = vmatprep.subr.mxu0 0.0
    %1118 = vmatpush2.msra.mxu0 0.0
    %1119 = vmatprep.subr.mxu0 0.0
    %1120 = vmatpush2.msra.mxu0 0.0
    %1121 = vmatprep.subr.mxu0 0.0
    %1122 = vmatpush2.msra.mxu0 0.0
    %1123 = vmatprep.subr.mxu0 0.0
    %1124 = vmatpush2.msra.mxu0 0.0
    %1125 = vmatprep.subr.mxu0 0.0
    %1126 = vmatpush2.msra.mxu0 0.0
    %1127 = vmatprep.subr.mxu0 0.0
    %1128 = vmatpush2.msra.mxu0 0.0
    %1129 = vmatprep.subr.mxu0 0.0
    %1130 = vmatpush2.msra.mxu0 0.0
    %1131 = vmatprep.mubr.f32.mxu0 0.0
    %1132 = vmatmul.mubr.f32.gmra.mxu0 %v1065
    %v1133 = vpop.f32.mrf.mxu0
    %v1134 = vadd.f32 0.0, %v1133
    %v1135 = vpop.f32.mrf.mxu0
    %1136 = vdwg.mxu0
    %v1137 = vadd.f32 %v182, %v1134
    %v1138 = vxor.u32 %v1137, 2147483648
    %v1139 = vmul.f32 %v1138, 1.442695
    %v1140 = vpow.pop %v1139
    %v1141 = vadd.f32 %v1140, 1.0
    %v1142 = vrcp.pop %v1141
    %v1143 = vmul.f32 1.0, %v1142
    %v1144 = vtanh.pop %v1137
    %v1146 = vrot.slane %v1037, 6
    %v1148 = vmul.f32 %v1143, %v1146
    %1150 = vrot.lane.b32.xlu0 %v1144, 32
    %v1151 = vpop.permute.xlu0 %1150
    %v1153 = vmul.f32 %v1143, %v1151
    %1155 = vrot.lane.b32.xlu0 %v1153, 32
    %v1156 = vpop.permute.xlu0 %1155
    %v1158 = vadd.f32 %v1148, %v1156
    %v1159 = vtanh.pop %v1158
    %1161 = vrot.lane.b32.xlu0 %v1159, 32
    %v1162 = vpop.permute.xlu0 %1161
    %v1164 = vmul.f32 %v1143, %v1162
    %1166 = vrot.lane.b32.xlu0 %v1164, 64
    %v1167 = vpop.permute.xlu0 %1166
    %v1168 = vsel %vm92, %v1167, 0
    %1170 = vmatprep.subr.mxu0 0.0
    %1171 = vmatpush1.msra.mxu0 0.0
    %1172 = vmatprep.subr.mxu0 0.0
    %1173 = vmatpush1.msra.mxu0 0.0
    %1174 = vmatprep.subr.mxu0 0.0
    %1175 = vmatpush1.msra.mxu0 0.0
    %1176 = vmatprep.subr.mxu0 0.0
    %1177 = vmatpush1.msra.mxu0 0.0
    %1178 = vmatprep.subr.mxu0 0.0
    %1179 = vmatpush1.msra.mxu0 0.0
    %1180 = vmatprep.subr.mxu0 0.0
    %1181 = vmatpush1.msra.mxu0 0.0
    %1182 = vmatprep.subr.mxu0 0.0
    %1183 = vmatpush1.msra.mxu0 0.0
    %1184 = vmatprep.subr.mxu0 0.0
    %1185 = vmatpush1.msra.mxu0 0.0
    %1186 = vmatprep.subr.mxu0 0.0
    %1187 = vmatpush1.msra.mxu0 0.0
    %1188 = vmatprep.subr.mxu0 0.0
    %1189 = vmatpush1.msra.mxu0 0.0
    %1190 = vmatprep.subr.mxu0 0.0
    %1191 = vmatpush1.msra.mxu0 0.0
    %1192 = vmatprep.subr.mxu0 0.0
    %1193 = vmatpush1.msra.mxu0 0.0
    %1194 = vmatprep.subr.mxu0 0.0
    %1195 = vmatpush1.msra.mxu0 %v193
    %1196 = vmatprep.subr.mxu0 0.0
    %1197 = vmatpush1.msra.mxu0 %v192
    %1198 = vmatprep.subr.mxu0 0.0
    %1199 = vmatpush1.msra.mxu0 %v191
    %1200 = vmatprep.subr.mxu0 0.0
    %1201 = vmatpush1.msra.mxu0 %v190
    %1202 = vmatprep.subr.mxu0 0.0
    %1203 = vmatpush2.msra.mxu0 0.0
    %1204 = vmatprep.subr.mxu0 0.0
    %1205 = vmatpush2.msra.mxu0 0.0
    %1206 = vmatprep.subr.mxu0 0.0
    %1207 = vmatpush2.msra.mxu0 0.0
    %1208 = vmatprep.subr.mxu0 0.0
    %1209 = vmatpush2.msra.mxu0 0.0
    %1210 = vmatprep.subr.mxu0 0.0
    %1211 = vmatpush2.msra.mxu0 0.0
    %1212 = vmatprep.subr.mxu0 0.0
    %1213 = vmatpush2.msra.mxu0 0.0
    %1214 = vmatprep.subr.mxu0 0.0
    %1215 = vmatpush2.msra.mxu0 0.0
    %1216 = vmatprep.subr.mxu0 0.0
    %1217 = vmatpush2.msra.mxu0 0.0
    %1218 = vmatprep.subr.mxu0 0.0
    %1219 = vmatpush2.msra.mxu0 0.0
    %1220 = vmatprep.subr.mxu0 0.0
    %1221 = vmatpush2.msra.mxu0 0.0
    %1222 = vmatprep.subr.mxu0 0.0
    %1223 = vmatpush2.msra.mxu0 0.0
    %1224 = vmatprep.subr.mxu0 0.0
    %1225 = vmatpush2.msra.mxu0 0.0
    %1226 = vmatprep.subr.mxu0 0.0
    %1227 = vmatpush2.msra.mxu0 0.0
    %1228 = vmatprep.subr.mxu0 0.0
    %1229 = vmatpush2.msra.mxu0 0.0
    %1230 = vmatprep.subr.mxu0 0.0
    %1231 = vmatpush2.msra.mxu0 0.0
    %1232 = vmatprep.subr.mxu0 0.0
    %1233 = vmatpush2.msra.mxu0 0.0
    %1234 = vmatprep.mubr.f32.mxu0 0.0
    %1235 = vmatmul.mubr.f32.gmra.mxu0 %v1168
    %v1236 = vpop.f32.mrf.mxu0
    %v1237 = vadd.f32 0.0, %v1236
    %v1238 = vpop.f32.mrf.mxu0
    %1239 = vdwg.mxu0
    %v1241 = vrot.slane %v1237, 6
    %v1243 = vadd.f32 %v182, %v1241
    %v1244 = vxor.u32 %v1243, 2147483648
    %v1245 = vmul.f32 %v1244, 1.442695
    %v1246 = vpow.pop %v1245
    %v1247 = vadd.f32 %v1246, 1.0
    %v1248 = vrcp.pop %v1247
    %v1249 = vmul.f32 1.0, %v1248
    %v1250 = vtanh.pop %v1243
    %v1252 = vrot.slane %v1158, 6
    %v1254 = vmul.f32 %v1249, %v1252
    %1256 = vrot.lane.b32.xlu0 %v1250, 32
    %v1257 = vpop.permute.xlu0 %1256
    %v1259 = vmul.f32 %v1249, %v1257
    %1261 = vrot.lane.b32.xlu0 %v1259, 32
    %v1262 = vpop.permute.xlu0 %1261
    %v1264 = vadd.f32 %v1254, %v1262
    %v1265 = vtanh.pop %v1264
    %1267 = vrot.lane.b32.xlu0 %v1265, 32
    %v1268 = vpop.permute.xlu0 %1267
    %v1270 = vmul.f32 %v1249, %v1268
    %v1272 = vrot.slane %v1270, 2
    %1273 = vrot.lane.b32.xlu0 %v1272, 64
    %v1274 = vpop.permute.xlu0 %1273
    %v1275 = vsel %vm92, %v1274, 0
    %1277 = vmatprep.subr.mxu0 0.0
    %1278 = vmatpush1.msra.mxu0 0.0
    %1279 = vmatprep.subr.mxu0 0.0
    %1280 = vmatpush1.msra.mxu0 0.0
    %1281 = vmatprep.subr.mxu0 0.0
    %1282 = vmatpush1.msra.mxu0 0.0
    %1283 = vmatprep.subr.mxu0 0.0
    %1284 = vmatpush1.msra.mxu0 0.0
    %1285 = vmatprep.subr.mxu0 0.0
    %1286 = vmatpush1.msra.mxu0 0.0
    %1287 = vmatprep.subr.mxu0 0.0
    %1288 = vmatpush1.msra.mxu0 0.0
    %1289 = vmatprep.subr.mxu0 0.0
    %1290 = vmatpush1.msra.mxu0 0.0
    %1291 = vmatprep.subr.mxu0 0.0
    %1292 = vmatpush1.msra.mxu0 0.0
    %1293 = vmatprep.subr.mxu0 0.0
    %1294 = vmatpush1.msra.mxu0 0.0
    %1295 = vmatprep.subr.mxu0 0.0
    %1296 = vmatpush1.msra.mxu0 0.0
    %1297 = vmatprep.subr.mxu0 0.0
    %1298 = vmatpush1.msra.mxu0 0.0
    %1299 = vmatprep.subr.mxu0 0.0
    %1300 = vmatpush1.msra.mxu0 0.0
    %1301 = vmatprep.subr.mxu0 0.0
    %1302 = vmatpush1.msra.mxu0 %v193
    %1303 = vmatprep.subr.mxu0 0.0
    %1304 = vmatpush1.msra.mxu0 %v192
    %1305 = vmatprep.subr.mxu0 0.0
    %1306 = vmatpush1.msra.mxu0 %v191
    %1307 = vmatprep.subr.mxu0 0.0
    %1308 = vmatpush1.msra.mxu0 %v190
    %1309 = vmatprep.subr.mxu0 0.0
    %1310 = vmatpush2.msra.mxu0 0.0
    %1311 = vmatprep.subr.mxu0 0.0
    %1312 = vmatpush2.msra.mxu0 0.0
    %1313 = vmatprep.subr.mxu0 0.0
    %1314 = vmatpush2.msra.mxu0 0.0
    %1315 = vmatprep.subr.mxu0 0.0
    %1316 = vmatpush2.msra.mxu0 0.0
    %1317 = vmatprep.subr.mxu0 0.0
    %1318 = vmatpush2.msra.mxu0 0.0
    %1319 = vmatprep.subr.mxu0 0.0
    %1320 = vmatpush2.msra.mxu0 0.0
    %1321 = vmatprep.subr.mxu0 0.0
    %1322 = vmatpush2.msra.mxu0 0.0
    %1323 = vmatprep.subr.mxu0 0.0
    %1324 = vmatpush2.msra.mxu0 0.0
    %1325 = vmatprep.subr.mxu0 0.0
    %1326 = vmatpush2.msra.mxu0 0.0
    %1327 = vmatprep.subr.mxu0 0.0
    %1328 = vmatpush2.msra.mxu0 0.0
    %1329 = vmatprep.subr.mxu0 0.0
    %1330 = vmatpush2.msra.mxu0 0.0
    %1331 = vmatprep.subr.mxu0 0.0
    %1332 = vmatpush2.msra.mxu0 0.0
    %1333 = vmatprep.subr.mxu0 0.0
    %1334 = vmatpush2.msra.mxu0 0.0
    %1335 = vmatprep.subr.mxu0 0.0
    %1336 = vmatpush2.msra.mxu0 0.0
    %1337 = vmatprep.subr.mxu0 0.0
    %1338 = vmatpush2.msra.mxu0 0.0
    %1339 = vmatprep.subr.mxu0 0.0
    %1340 = vmatpush2.msra.mxu0 0.0
    %1341 = vmatprep.mubr.f32.mxu0 0.0
    %1342 = vmatmul.mubr.f32.gmra.mxu0 %v1275
    %v1343 = vpop.f32.mrf.mxu0
    %v1344 = vadd.f32 0.0, %v1343
    %v1345 = vpop.f32.mrf.mxu0
    %1346 = vdwg.mxu0
    %v1348 = vrot.slane %v1344, 4
    %v1350 = vadd.f32 %v182, %v1348
    %v1351 = vxor.u32 %v1350, 2147483648
    %v1352 = vmul.f32 %v1351, 1.442695
    %v1353 = vpow.pop %v1352
    %v1354 = vadd.f32 %v1353, 1.0
    %v1355 = vrcp.pop %v1354
    %v1356 = vmul.f32 1.0, %v1355
    %v1357 = vtanh.pop %v1350
    %v1359 = vrot.slane %v1264, 6
    %v1361 = vmul.f32 %v1356, %v1359
    %1363 = vrot.lane.b32.xlu0 %v1357, 32
    %v1364 = vpop.permute.xlu0 %1363
    %v1366 = vmul.f32 %v1356, %v1364
    %1368 = vrot.lane.b32.xlu0 %v1366, 32
    %v1369 = vpop.permute.xlu0 %1368
    %v1371 = vadd.f32 %v1361, %v1369
    %v1372 = vtanh.pop %v1371
    %1374 = vrot.lane.b32.xlu0 %v1372, 32
    %v1375 = vpop.permute.xlu0 %1374
    %v1377 = vmul.f32 %v1356, %v1375
    %v1379 = vrot.slane %v1377, 4
    %1380 = vrot.lane.b32.xlu0 %v1379, 64
    %v1381 = vpop.permute.xlu0 %1380
    %v1382 = vsel %vm92, %v1381, 0
    %1384 = vmatprep.subr.mxu0 0.0
    %1385 = vmatpush1.msra.mxu0 0.0
    %1386 = vmatprep.subr.mxu0 0.0
    %1387 = vmatpush1.msra.mxu0 0.0
    %1388 = vmatprep.subr.mxu0 0.0
    %1389 = vmatpush1.msra.mxu0 0.0
    %1390 = vmatprep.subr.mxu0 0.0
    %1391 = vmatpush1.msra.mxu0 0.0
    %1392 = vmatprep.subr.mxu0 0.0
    %1393 = vmatpush1.msra.mxu0 0.0
    %1394 = vmatprep.subr.mxu0 0.0
    %1395 = vmatpush1.msra.mxu0 0.0
    %1396 = vmatprep.subr.mxu0 0.0
    %1397 = vmatpush1.msra.mxu0 0.0
    %1398 = vmatprep.subr.mxu0 0.0
    %1399 = vmatpush1.msra.mxu0 0.0
    %1400 = vmatprep.subr.mxu0 0.0
    %1401 = vmatpush1.msra.mxu0 0.0
    %1402 = vmatprep.subr.mxu0 0.0
    %1403 = vmatpush1.msra.mxu0 0.0
    %1404 = vmatprep.subr.mxu0 0.0
    %1405 = vmatpush1.msra.mxu0 0.0
    %1406 = vmatprep.subr.mxu0 0.0
    %1407 = vmatpush1.msra.mxu0 0.0
    %1408 = vmatprep.subr.mxu0 0.0
    %1409 = vmatpush1.msra.mxu0 %v193
    %1410 = vmatprep.subr.mxu0 0.0
    %1411 = vmatpush1.msra.mxu0 %v192
    %1412 = vmatprep.subr.mxu0 0.0
    %1413 = vmatpush1.msra.mxu0 %v191
    %1414 = vmatprep.subr.mxu0 0.0
    %1415 = vmatpush1.msra.mxu0 %v190
    %1416 = vmatprep.subr.mxu0 0.0
    %1417 = vmatpush2.msra.mxu0 0.0
    %1418 = vmatprep.subr.mxu0 0.0
    %1419 = vmatpush2.msra.mxu0 0.0
    %1420 = vmatprep.subr.mxu0 0.0
    %1421 = vmatpush2.msra.mxu0 0.0
    %1422 = vmatprep.subr.mxu0 0.0
    %1423 = vmatpush2.msra.mxu0 0.0
    %1424 = vmatprep.subr.mxu0 0.0
    %1425 = vmatpush2.msra.mxu0 0.0
    %1426 = vmatprep.subr.mxu0 0.0
    %1427 = vmatpush2.msra.mxu0 0.0
    %1428 = vmatprep.subr.mxu0 0.0
    %1429 = vmatpush2.msra.mxu0 0.0
    %1430 = vmatprep.subr.mxu0 0.0
    %1431 = vmatpush2.msra.mxu0 0.0
    %1432 = vmatprep.subr.mxu0 0.0
    %1433 = vmatpush2.msra.mxu0 0.0
    %1434 = vmatprep.subr.mxu0 0.0
    %1435 = vmatpush2.msra.mxu0 0.0
    %1436 = vmatprep.subr.mxu0 0.0
    %1437 = vmatpush2.msra.mxu0 0.0
    %1438 = vmatprep.subr.mxu0 0.0
    %1439 = vmatpush2.msra.mxu0 0.0
    %1440 = vmatprep.subr.mxu0 0.0
    %1441 = vmatpush2.msra.mxu0 0.0
    %1442 = vmatprep.subr.mxu0 0.0
    %1443 = vmatpush2.msra.mxu0 0.0
    %1444 = vmatprep.subr.mxu0 0.0
    %1445 = vmatpush2.msra.mxu0 0.0
    %1446 = vmatprep.subr.mxu0 0.0
    %1447 = vmatpush2.msra.mxu0 0.0
    %1448 = vmatprep.mubr.f32.mxu0 0.0
    %1449 = vmatmul.mubr.f32.gmra.mxu0 %v1382
    %v1450 = vpop.f32.mrf.mxu0
    %v1451 = vadd.f32 0.0, %v1450
    %v1452 = vpop.f32.mrf.mxu0
    %1453 = vdwg.mxu0
    %v1455 = vrot.slane %v1451, 2
    %v1457 = vadd.f32 %v182, %v1455
    %v1458 = vxor.u32 %v1457, 2147483648
    %v1459 = vmul.f32 %v1458, 1.442695
    %v1460 = vpow.pop %v1459
    %v1461 = vadd.f32 %v1460, 1.0
    %v1462 = vrcp.pop %v1461
    %v1463 = vmul.f32 1.0, %v1462
    %v1464 = vtanh.pop %v1457
    %v1466 = vrot.slane %v1371, 6
    %v1468 = vmul.f32 %v1463, %v1466
    %1470 = vrot.lane.b32.xlu0 %v1464, 32
    %v1471 = vpop.permute.xlu0 %1470
    %v1473 = vmul.f32 %v1463, %v1471
    %1475 = vrot.lane.b32.xlu0 %v1473, 32
    %v1476 = vpop.permute.xlu0 %1475
    %v1478 = vadd.f32 %v1468, %v1476
    %v1479 = vtanh.pop %v1478
    %1481 = vrot.lane.b32.xlu0 %v1479, 32
    %v1482 = vpop.permute.xlu0 %1481
    %v1484 = vmul.f32 %v1463, %v1482
    %v1486 = vrot.slane %v1484, 6
    %1487 = vrot.lane.b32.xlu0 %v1486, 64
    %v1488 = vpop.permute.xlu0 %1487
    %v1489 = vsel %vm92, %v1488, 0
    %1491 = vmatprep.subr.mxu0 0.0
    %1492 = vmatpush1.msra.mxu0 0.0
    %1493 = vmatprep.subr.mxu0 0.0
    %1494 = vmatpush1.msra.mxu0 0.0
    %1495 = vmatprep.subr.mxu0 0.0
    %1496 = vmatpush1.msra.mxu0 0.0
    %1497 = vmatprep.subr.mxu0 0.0
    %1498 = vmatpush1.msra.mxu0 0.0
    %1499 = vmatprep.subr.mxu0 0.0
    %1500 = vmatpush1.msra.mxu0 0.0
    %1501 = vmatprep.subr.mxu0 0.0
    %1502 = vmatpush1.msra.mxu0 0.0
    %1503 = vmatprep.subr.mxu0 0.0
    %1504 = vmatpush1.msra.mxu0 0.0
    %1505 = vmatprep.subr.mxu0 0.0
    %1506 = vmatpush1.msra.mxu0 0.0
    %1507 = vmatprep.subr.mxu0 0.0
    %1508 = vmatpush1.msra.mxu0 0.0
    %1509 = vmatprep.subr.mxu0 0.0
    %1510 = vmatpush1.msra.mxu0 0.0
    %1511 = vmatprep.subr.mxu0 0.0
    %1512 = vmatpush1.msra.mxu0 0.0
    %1513 = vmatprep.subr.mxu0 0.0
    %1514 = vmatpush1.msra.mxu0 0.0
    %1515 = vmatprep.subr.mxu0 0.0
    %1516 = vmatpush1.msra.mxu0 %v193
    %1517 = vmatprep.subr.mxu0 0.0
    %1518 = vmatpush1.msra.mxu0 %v192
    %1519 = vmatprep.subr.mxu0 0.0
    %1520 = vmatpush1.msra.mxu0 %v191
    %1521 = vmatprep.subr.mxu0 0.0
    %1522 = vmatpush1.msra.mxu0 %v190
    %1523 = vmatprep.subr.mxu0 0.0
    %1524 = vmatpush2.msra.mxu0 0.0
    %1525 = vmatprep.subr.mxu0 0.0
    %1526 = vmatpush2.msra.mxu0 0.0
    %1527 = vmatprep.subr.mxu0 0.0
    %1528 = vmatpush2.msra.mxu0 0.0
    %1529 = vmatprep.subr.mxu0 0.0
    %1530 = vmatpush2.msra.mxu0 0.0
    %1531 = vmatprep.subr.mxu0 0.0
    %1532 = vmatpush2.msra.mxu0 0.0
    %1533 = vmatprep.subr.mxu0 0.0
    %1534 = vmatpush2.msra.mxu0 0.0
    %1535 = vmatprep.subr.mxu0 0.0
    %1536 = vmatpush2.msra.mxu0 0.0
    %1537 = vmatprep.subr.mxu0 0.0
    %1538 = vmatpush2.msra.mxu0 0.0
    %1539 = vmatprep.subr.mxu0 0.0
    %1540 = vmatpush2.msra.mxu0 0.0
    %1541 = vmatprep.subr.mxu0 0.0
    %1542 = vmatpush2.msra.mxu0 0.0
    %1543 = vmatprep.subr.mxu0 0.0
    %1544 = vmatpush2.msra.mxu0 0.0
    %1545 = vmatprep.subr.mxu0 0.0
    %1546 = vmatpush2.msra.mxu0 0.0
    %1547 = vmatprep.subr.mxu0 0.0
    %1548 = vmatpush2.msra.mxu0 0.0
    %1549 = vmatprep.subr.mxu0 0.0
    %1550 = vmatpush2.msra.mxu0 0.0
    %1551 = vmatprep.subr.mxu0 0.0
    %1552 = vmatpush2.msra.mxu0 0.0
    %1553 = vmatprep.subr.mxu0 0.0
    %1554 = vmatpush2.msra.mxu0 0.0
    %1555 = vmatprep.mubr.f32.mxu0 0.0
    %1556 = vmatmul.mubr.f32.gmra.mxu0 %v1489
    %v1557 = vpop.f32.mrf.mxu0
    %v1558 = vadd.f32 0.0, %v1557
    %v1559 = vpop.f32.mrf.mxu0
    %1560 = vdwg.mxu0
    %v1561 = vadd.f32 %v187, %v1558
    %v1562 = vxor.u32 %v1561, 2147483648
    %v1563 = vmul.f32 %v1562, 1.442695
    %v1564 = vpow.pop %v1563
    %v1565 = vadd.f32 %v1564, 1.0
    %v1566 = vrcp.pop %v1565
    %v1567 = vmul.f32 1.0, %v1566
    %v1568 = vtanh.pop %v1561
    %v1570 = vrot.slane %v1478, 6
    %v1572 = vmul.f32 %v1567, %v1570
    %1574 = vrot.lane.b32.xlu0 %v1568, 32
    %v1575 = vpop.permute.xlu0 %1574
    %v1577 = vmul.f32 %v1567, %v1575
    %1579 = vrot.lane.b32.xlu0 %v1577, 32
    %v1580 = vpop.permute.xlu0 %1579
    %v1582 = vadd.f32 %v1572, %v1580
    %v1583 = vtanh.pop %v1582
    %1585 = vrot.lane.b32.xlu0 %v1583, 32
    %v1586 = vpop.permute.xlu0 %1585
    %v1588 = vmul.f32 %v1567, %v1586
    %1590 = vrot.lane.b32.xlu0 %v1588, 64
    %v1591 = vpop.permute.xlu0 %1590
    %v1592 = vsel %vm92, %v1591, 0
    %1594 = vmatprep.subr.mxu0 0.0
    %1595 = vmatpush1.msra.mxu0 0.0
    %1596 = vmatprep.subr.mxu0 0.0
    %1597 = vmatpush1.msra.mxu0 0.0
    %1598 = vmatprep.subr.mxu0 0.0
    %1599 = vmatpush1.msra.mxu0 0.0
    %1600 = vmatprep.subr.mxu0 0.0
    %1601 = vmatpush1.msra.mxu0 0.0
    %1602 = vmatprep.subr.mxu0 0.0
    %1603 = vmatpush1.msra.mxu0 0.0
    %1604 = vmatprep.subr.mxu0 0.0
    %1605 = vmatpush1.msra.mxu0 0.0
    %1606 = vmatprep.subr.mxu0 0.0
    %1607 = vmatpush1.msra.mxu0 0.0
    %1608 = vmatprep.subr.mxu0 0.0
    %1609 = vmatpush1.msra.mxu0 0.0
    %1610 = vmatprep.subr.mxu0 0.0
    %1611 = vmatpush1.msra.mxu0 0.0
    %1612 = vmatprep.subr.mxu0 0.0
    %1613 = vmatpush1.msra.mxu0 0.0
    %1614 = vmatprep.subr.mxu0 0.0
    %1615 = vmatpush1.msra.mxu0 0.0
    %1616 = vmatprep.subr.mxu0 0.0
    %1617 = vmatpush1.msra.mxu0 0.0
    %1618 = vmatprep.subr.mxu0 0.0
    %1619 = vmatpush1.msra.mxu0 %v193
    %1620 = vmatprep.subr.mxu0 0.0
    %1621 = vmatpush1.msra.mxu0 %v192
    %1622 = vmatprep.subr.mxu0 0.0
    %1623 = vmatpush1.msra.mxu0 %v191
    %1624 = vmatprep.subr.mxu0 0.0
    %1625 = vmatpush1.msra.mxu0 %v190
    %1626 = vmatprep.subr.mxu0 0.0
    %1627 = vmatpush2.msra.mxu0 0.0
    %1628 = vmatprep.subr.mxu0 0.0
    %1629 = vmatpush2.msra.mxu0 0.0
    %1630 = vmatprep.subr.mxu0 0.0
    %1631 = vmatpush2.msra.mxu0 0.0
    %1632 = vmatprep.subr.mxu0 0.0
    %1633 = vmatpush2.msra.mxu0 0.0
    %1634 = vmatprep.subr.mxu0 0.0
    %1635 = vmatpush2.msra.mxu0 0.0
    %1636 = vmatprep.subr.mxu0 0.0
    %1637 = vmatpush2.msra.mxu0 0.0
    %1638 = vmatprep.subr.mxu0 0.0
    %1639 = vmatpush2.msra.mxu0 0.0
    %1640 = vmatprep.subr.mxu0 0.0
    %1641 = vmatpush2.msra.mxu0 0.0
    %1642 = vmatprep.subr.mxu0 0.0
    %1643 = vmatpush2.msra.mxu0 0.0
    %1644 = vmatprep.subr.mxu0 0.0
    %1645 = vmatpush2.msra.mxu0 0.0
    %1646 = vmatprep.subr.mxu0 0.0
    %1647 = vmatpush2.msra.mxu0 0.0
    %1648 = vmatprep.subr.mxu0 0.0
    %1649 = vmatpush2.msra.mxu0 0.0
    %1650 = vmatprep.subr.mxu0 0.0
    %1651 = vmatpush2.msra.mxu0 0.0
    %1652 = vmatprep.subr.mxu0 0.0
    %1653 = vmatpush2.msra.mxu0 0.0
    %1654 = vmatprep.subr.mxu0 0.0
    %1655 = vmatpush2.msra.mxu0 0.0
    %1656 = vmatprep.subr.mxu0 0.0
    %1657 = vmatpush2.msra.mxu0 0.0
    %1658 = vmatprep.mubr.f32.mxu0 0.0
    %1659 = vmatmul.mubr.f32.gmra.mxu0 %v1592
    %v1660 = vpop.f32.mrf.mxu0
    %v1661 = vadd.f32 0.0, %v1660
    %v1662 = vpop.f32.mrf.mxu0
    %1663 = vdwg.mxu0
    %v1665 = vrot.slane %v1661, 6
    %v1667 = vadd.f32 %v187, %v1665
    %v1668 = vxor.u32 %v1667, 2147483648
    %v1669 = vmul.f32 %v1668, 1.442695
    %v1670 = vpow.pop %v1669
    %v1671 = vadd.f32 %v1670, 1.0
    %v1672 = vrcp.pop %v1671
    %v1673 = vmul.f32 1.0, %v1672
    %v1674 = vtanh.pop %v1667
    %v1676 = vrot.slane %v1582, 6
    %v1678 = vmul.f32 %v1673, %v1676
    %1680 = vrot.lane.b32.xlu0 %v1674, 32
    %v1681 = vpop.permute.xlu0 %1680
    %v1683 = vmul.f32 %v1673, %v1681
    %1685 = vrot.lane.b32.xlu0 %v1683, 32
    %v1686 = vpop.permute.xlu0 %1685
    %v1688 = vadd.f32 %v1678, %v1686
    %v1689 = vtanh.pop %v1688
    %1691 = vrot.lane.b32.xlu0 %v1689, 32
    %v1692 = vpop.permute.xlu0 %1691
    %v1694 = vmul.f32 %v1673, %v1692
    %v1696 = vrot.slane %v1694, 2
    %1697 = vrot.lane.b32.xlu0 %v1696, 64
    %v1698 = vpop.permute.xlu0 %1697
    %v1699 = vsel %vm92, %v1698, 0
    %1701 = vmatprep.subr.mxu0 0.0
    %1702 = vmatpush1.msra.mxu0 0.0
    %1703 = vmatprep.subr.mxu0 0.0
    %1704 = vmatpush1.msra.mxu0 0.0
    %1705 = vmatprep.subr.mxu0 0.0
    %1706 = vmatpush1.msra.mxu0 0.0
    %1707 = vmatprep.subr.mxu0 0.0
    %1708 = vmatpush1.msra.mxu0 0.0
    %1709 = vmatprep.subr.mxu0 0.0
    %1710 = vmatpush1.msra.mxu0 0.0
    %1711 = vmatprep.subr.mxu0 0.0
    %1712 = vmatpush1.msra.mxu0 0.0
    %1713 = vmatprep.subr.mxu0 0.0
    %1714 = vmatpush1.msra.mxu0 0.0
    %1715 = vmatprep.subr.mxu0 0.0
    %1716 = vmatpush1.msra.mxu0 0.0
    %1717 = vmatprep.subr.mxu0 0.0
    %1718 = vmatpush1.msra.mxu0 0.0
    %1719 = vmatprep.subr.mxu0 0.0
    %1720 = vmatpush1.msra.mxu0 0.0
    %1721 = vmatprep.subr.mxu0 0.0
    %1722 = vmatpush1.msra.mxu0 0.0
    %1723 = vmatprep.subr.mxu0 0.0
    %1724 = vmatpush1.msra.mxu0 0.0
    %1725 = vmatprep.subr.mxu0 0.0
    %1726 = vmatpush1.msra.mxu0 %v193
    %1727 = vmatprep.subr.mxu0 0.0
    %1728 = vmatpush1.msra.mxu0 %v192
    %1729 = vmatprep.subr.mxu0 0.0
    %1730 = vmatpush1.msra.mxu0 %v191
    %1731 = vmatprep.subr.mxu0 0.0
    %1732 = vmatpush1.msra.mxu0 %v190
    %1733 = vmatprep.subr.mxu0 0.0
    %1734 = vmatpush2.msra.mxu0 0.0
    %1735 = vmatprep.subr.mxu0 0.0
    %1736 = vmatpush2.msra.mxu0 0.0
    %1737 = vmatprep.subr.mxu0 0.0
    %1738 = vmatpush2.msra.mxu0 0.0
    %1739 = vmatprep.subr.mxu0 0.0
    %1740 = vmatpush2.msra.mxu0 0.0
    %1741 = vmatprep.subr.mxu0 0.0
    %1742 = vmatpush2.msra.mxu0 0.0
    %1743 = vmatprep.subr.mxu0 0.0
    %1744 = vmatpush2.msra.mxu0 0.0
    %1745 = vmatprep.subr.mxu0 0.0
    %1746 = vmatpush2.msra.mxu0 0.0
    %1747 = vmatprep.subr.mxu0 0.0
    %1748 = vmatpush2.msra.mxu0 0.0
    %1749 = vmatprep.subr.mxu0 0.0
    %1750 = vmatpush2.msra.mxu0 0.0
    %1751 = vmatprep.subr.mxu0 0.0
    %1752 = vmatpush2.msra.mxu0 0.0
    %1753 = vmatprep.subr.mxu0 0.0
    %1754 = vmatpush2.msra.mxu0 0.0
    %1755 = vmatprep.subr.mxu0 0.0
    %1756 = vmatpush2.msra.mxu0 0.0
    %1757 = vmatprep.subr.mxu0 0.0
    %1758 = vmatpush2.msra.mxu0 0.0
    %1759 = vmatprep.subr.mxu0 0.0
    %1760 = vmatpush2.msra.mxu0 0.0
    %1761 = vmatprep.subr.mxu0 0.0
    %1762 = vmatpush2.msra.mxu0 0.0
    %1763 = vmatprep.subr.mxu0 0.0
    %1764 = vmatpush2.msra.mxu0 0.0
    %1765 = vmatprep.mubr.f32.mxu0 0.0
    %1766 = vmatmul.mubr.f32.gmra.mxu0 %v1699
    %v1767 = vpop.f32.mrf.mxu0
    %v1768 = vadd.f32 0.0, %v1767
    %v1769 = vpop.f32.mrf.mxu0
    %1770 = vdwg.mxu0
    %v1772 = vrot.slane %v1768, 4
    %v1774 = vadd.f32 %v187, %v1772
    %v1775 = vxor.u32 %v1774, 2147483648
    %v1776 = vmul.f32 %v1775, 1.442695
    %v1777 = vpow.pop %v1776
    %v1778 = vadd.f32 %v1777, 1.0
    %v1779 = vrcp.pop %v1778
    %v1780 = vmul.f32 1.0, %v1779
    %v1781 = vtanh.pop %v1774
    %v1783 = vrot.slane %v1688, 6
    %v1785 = vmul.f32 %v1780, %v1783
    %1787 = vrot.lane.b32.xlu0 %v1781, 32
    %v1788 = vpop.permute.xlu0 %1787
    %v1790 = vmul.f32 %v1780, %v1788
    %1792 = vrot.lane.b32.xlu0 %v1790, 32
    %v1793 = vpop.permute.xlu0 %1792
    %v1795 = vadd.f32 %v1785, %v1793
    %v1796 = vtanh.pop %v1795
    %1798 = vrot.lane.b32.xlu0 %v1796, 32
    %v1799 = vpop.permute.xlu0 %1798
    %v1801 = vmul.f32 %v1780, %v1799
    %v1803 = vrot.slane %v1801, 4
    %1804 = vrot.lane.b32.xlu0 %v1803, 64
    %v1805 = vpop.permute.xlu0 %1804
    %v1806 = vsel %vm92, %v1805, 0
    %1808 = vmatprep.subr.mxu0 0.0
    %1809 = vmatpush1.msra.mxu0 0.0
    %1810 = vmatprep.subr.mxu0 0.0
    %1811 = vmatpush1.msra.mxu0 0.0
    %1812 = vmatprep.subr.mxu0 0.0
    %1813 = vmatpush1.msra.mxu0 0.0
    %1814 = vmatprep.subr.mxu0 0.0
    %1815 = vmatpush1.msra.mxu0 0.0
    %1816 = vmatprep.subr.mxu0 0.0
    %1817 = vmatpush1.msra.mxu0 0.0
    %1818 = vmatprep.subr.mxu0 0.0
    %1819 = vmatpush1.msra.mxu0 0.0
    %1820 = vmatprep.subr.mxu0 0.0
    %1821 = vmatpush1.msra.mxu0 0.0
    %1822 = vmatprep.subr.mxu0 0.0
    %1823 = vmatpush1.msra.mxu0 0.0
    %1824 = vmatprep.subr.mxu0 0.0
    %1825 = vmatpush1.msra.mxu0 0.0
    %1826 = vmatprep.subr.mxu0 0.0
    %1827 = vmatpush1.msra.mxu0 0.0
    %1828 = vmatprep.subr.mxu0 0.0
    %1829 = vmatpush1.msra.mxu0 0.0
    %1830 = vmatprep.subr.mxu0 0.0
    %1831 = vmatpush1.msra.mxu0 0.0
    %1832 = vmatprep.subr.mxu0 0.0
    %1833 = vmatpush1.msra.mxu0 %v193
    %1834 = vmatprep.subr.mxu0 0.0
    %1835 = vmatpush1.msra.mxu0 %v192
    %1836 = vmatprep.subr.mxu0 0.0
    %1837 = vmatpush1.msra.mxu0 %v191
    %1838 = vmatprep.subr.mxu0 0.0
    %1839 = vmatpush1.msra.mxu0 %v190
    %1840 = vmatprep.subr.mxu0 0.0
    %1841 = vmatpush2.msra.mxu0 0.0
    %1842 = vmatprep.subr.mxu0 0.0
    %1843 = vmatpush2.msra.mxu0 0.0
    %1844 = vmatprep.subr.mxu0 0.0
    %1845 = vmatpush2.msra.mxu0 0.0
    %1846 = vmatprep.subr.mxu0 0.0
    %1847 = vmatpush2.msra.mxu0 0.0
    %1848 = vmatprep.subr.mxu0 0.0
    %1849 = vmatpush2.msra.mxu0 0.0
    %1850 = vmatprep.subr.mxu0 0.0
    %1851 = vmatpush2.msra.mxu0 0.0
    %1852 = vmatprep.subr.mxu0 0.0
    %1853 = vmatpush2.msra.mxu0 0.0
    %1854 = vmatprep.subr.mxu0 0.0
    %1855 = vmatpush2.msra.mxu0 0.0
    %1856 = vmatprep.subr.mxu0 0.0
    %1857 = vmatpush2.msra.mxu0 0.0
    %1858 = vmatprep.subr.mxu0 0.0
    %1859 = vmatpush2.msra.mxu0 0.0
    %1860 = vmatprep.subr.mxu0 0.0
    %1861 = vmatpush2.msra.mxu0 0.0
    %1862 = vmatprep.subr.mxu0 0.0
    %1863 = vmatpush2.msra.mxu0 0.0
    %1864 = vmatprep.subr.mxu0 0.0
    %1865 = vmatpush2.msra.mxu0 0.0
    %1866 = vmatprep.subr.mxu0 0.0
    %1867 = vmatpush2.msra.mxu0 0.0
    %1868 = vmatprep.subr.mxu0 0.0
    %1869 = vmatpush2.msra.mxu0 0.0
    %1870 = vmatprep.subr.mxu0 0.0
    %1871 = vmatpush2.msra.mxu0 0.0
    %1872 = vmatprep.mubr.f32.mxu0 0.0
    %1873 = vmatmul.mubr.f32.gmra.mxu0 %v1806
    %v1874 = vpop.f32.mrf.mxu0
    %v1875 = vadd.f32 0.0, %v1874
    %v1876 = vpop.f32.mrf.mxu0
    %1877 = vdwg.mxu0
    %v1879 = vrot.slane %v1875, 2
    %v1881 = vadd.f32 %v187, %v1879
    %v1882 = vxor.u32 %v1881, 2147483648
    %v1883 = vmul.f32 %v1882, 1.442695
    %v1884 = vpow.pop %v1883
    %v1885 = vadd.f32 %v1884, 1.0
    %v1886 = vrcp.pop %v1885
    %v1887 = vmul.f32 1.0, %v1886
    %v1888 = vtanh.pop %v1881
    %v1890 = vrot.slane %v1795, 6
    %v1892 = vmul.f32 %v1887, %v1890
    %1894 = vrot.lane.b32.xlu0 %v1888, 32
    %v1895 = vpop.permute.xlu0 %1894
    %v1897 = vmul.f32 %v1887, %v1895
    %1899 = vrot.lane.b32.xlu0 %v1897, 32
    %v1900 = vpop.permute.xlu0 %1899
    %v1902 = vadd.f32 %v1892, %v1900
    %v1903 = vtanh.pop %v1902
    %1905 = vrot.lane.b32.xlu0 %v1903, 32
    %v1906 = vpop.permute.xlu0 %1905
    %v1908 = vmul.f32 %v1887, %v1906
    %v1910 = vrot.slane %v1908, 1
    %v1912 = vsub.f32 %v1908, %v1910
    %v1913 = vand.u32 2147483647, %v1912
    %1915 = vrot.lane.b32.xlu0 %v1913, 64
    %v1916 = vpop.permute.xlu0 %1915
    %v1918 = vsel %vm1053, %v1916, 0.0
    %1919 = vadd.xlane.f32.xlu0 %v1918
    %v1920 = vpop.xlane.xlu0 %1919
    %vm1921 = vcmp.eq.s32.totalorder %v197, 1
    %v1922 = vsub.f32 0.0, %v1920
    %v1923 = vmul.f32 %v1922, 1.442695
    %v1924 = vpow.pop %v1923
    %v1925 = vsel %vm1921, %v1924, %v1061
    %vm1926 = vcmask 14342
    %1927 = vst.msk [vmem:[#allocation10 - $0x6] sm:$0x40] %vm1926, %v1925
    // Predicated region
    $region42: #{tpu_custom_call.1} parent=1 // pred_check
      _
    $region43: #{tpu_custom_call.1} parent=1 // pred_check_branch
      %1929 = sbr.rel (0) target = $region45
    $region44: #{tpu_custom_call.1} parent=1 // pred_region
      %s1931 = ssub.s32 16, 16
      %1932 = vsyncadd [#allocation4], %s1931
      %s1934 = sshll.u32 [#allocation10], 4
      %s1935 = int_to_ptr.vmem [resolvable:$true] %s1934
      %1937 = dma.vmem_to_hbm [thread:$0]  %s1935, 16, %s6, [#allocation4]
    $region45: #{tpu_custom_call.1} parent=1 // pred_fallthru
      _
    // Predicated region
    $region46: #{tpu_custom_call.1} parent=1 // pred_check
      _
    $region47: #{tpu_custom_call.1} parent=1 // pred_check_branch
      %1939 = sbr.rel (0) target = $region49
    $region48: #{tpu_custom_call.1} parent=1 // pred_region
      %1940 = dma.done [#allocation4], 16
    $region49: #{tpu_custom_call.1} parent=1 // pred_fallthru
      _
    %1941 = vsyncpa [#allocation3], 1
    %1942 = vsyncpa [#allocation6], 1
    %1943 = vsyncpa [#allocation9], 1
    %1944 = vsyncpa [#allocation4], 1

</llo_original>
